<compile_context>
chip_gen: v5e
topology: v5e:2x2
jax: 0.10.0
libtpu: 0.0.40
codegen_flags: <defaults>
</compile_context>

<pallas_src>
import functools

import jax
import jax.numpy as jnp
from jax.experimental import pallas as pl
from jax.experimental.pallas import tpu as pltpu

LN_EPS = 1e-5  # torch.nn.LayerNorm default


def _layer_norm(x, gamma, beta):
    # PyTorch LayerNorm: biased variance, eps inside rsqrt, affine.  f32 math.
    mean = jnp.mean(x, axis=-1, keepdims=True)
    var = jnp.mean(jnp.square(x - mean), axis=-1, keepdims=True)
    return (x - mean) * jax.lax.rsqrt(var + LN_EPS) * gamma + beta


def _gelu_exact(x):
    # torch.nn.GELU() default (erf form).
    return 0.5 * x * (1.0 + jax.lax.erf(x * (2.0 ** -0.5)))


# ---------------------------------------------------------------------------
# Fused kernel: embeddings + all encoder layers + final LayerNorm
# ---------------------------------------------------------------------------
def fused_transformer_kernel(emb_ref, vec_ref, wqkv_ref, wo_ref,
                             w1_ref, b1_ref, w2_ref, fin_ref, o_ref,
                             *, num_heads, dim_head, seq_len):
    layer = pl.program_id(1)
    depth = pl.num_programs(1)
    TB, S_pad, D = o_ref.shape
    inner = num_heads * dim_head
    rows = TB * S_pad

    # ---- layer 0: initialize the VMEM-resident activation from the embeddings ----
    @pl.when(layer == 0)
    def _():
        o_ref[...] = emb_ref[...]                     # token + positional, f32

    x = o_ref[...].reshape(rows, D)                   # f32 carry (S_pad % 8 == 0)

    # Packed per-layer vectors: [ln1_g, ln1_b, ln2_g, ln2_b, bo, b2]
    vecs = vec_ref[0]                                 # (6, D) f32
    ln1_g, ln1_b = vecs[0:1], vecs[1:2]
    ln2_g, ln2_b = vecs[2:3], vecs[3:4]
    bo, b2 = vecs[4:5], vecs[5:6]

    # ---- self-attention block (pre-norm + residual) ----
    h = _layer_norm(x, ln1_g, ln1_b).astype(jnp.bfloat16)
    # Single fused QKV matmul; the attention scale is already folded into Wq.
    qkv = jnp.dot(h, wqkv_ref[0], preferred_element_type=jnp.float32)   # (rows, 3*inner)
    qkv = qkv.astype(jnp.bfloat16).reshape(TB, S_pad, 3 * inner)

    head_outs = []
    for hd in range(num_heads):                       # static loop; batched over TB
        q_h = qkv[..., hd * dim_head:(hd + 1) * dim_head]
        k_h = qkv[..., inner + hd * dim_head:inner + (hd + 1) * dim_head]
        v_h = qkv[..., 2 * inner + hd * dim_head:2 * inner + (hd + 1) * dim_head]
        s = jnp.einsum('bqd,bkd->bqk', q_h, k_h,
                       preferred_element_type=jnp.float32)              # (TB,S,S) f32
        if seq_len < S_pad:                           # mask padded key positions
            kidx = jax.lax.broadcasted_iota(jnp.int32, s.shape, 2)
            s = jnp.where(kidx < seq_len, s, jnp.float32(-1e30))
        s = s - jnp.max(s, axis=-1, keepdims=True)    # numerically stable softmax
        p = jnp.exp(s)
        p = p * pl.reciprocal(jnp.sum(p, axis=-1, keepdims=True), approx=False)
        head_outs.append(jnp.einsum('bqk,bkd->bqd', p.astype(jnp.bfloat16), v_h,
                                    preferred_element_type=jnp.float32))
    # Lane-dense (rows, inner) attention output -> one full-K Wo matmul.
    attn = jnp.concatenate(head_outs, axis=-1).reshape(rows, inner)
    attn = jnp.dot(attn.astype(jnp.bfloat16), wo_ref[0],
                   preferred_element_type=jnp.float32) + bo
    x = x + attn

    # ---- feed-forward block (pre-norm + residual) ----
    h = _layer_norm(x, ln2_g, ln2_b).astype(jnp.bfloat16)
    hf = jnp.dot(h, w1_ref[0], preferred_element_type=jnp.float32) + b1_ref[0]
    hf = _gelu_exact(hf).astype(jnp.bfloat16)
    x = x + jnp.dot(hf, w2_ref[0], preferred_element_type=jnp.float32) + b2

    # ---- write the carry; apply the final LayerNorm on the last layer ----
    @pl.when(layer < depth - 1)
    def _():
        o_ref[...] = x.reshape(TB, S_pad, D)

    @pl.when(layer == depth - 1)
    def _():
        fin = fin_ref[...]                            # (2, D): [gamma, beta]
        o_ref[...] = _layer_norm(x, fin[0:1], fin[1:2]).reshape(TB, S_pad, D)


# ---------------------------------------------------------------------------
# Wrapper (pallas_call plumbing)
# ---------------------------------------------------------------------------
def _pick_block_batch(batch, s_pad, max_rows=512):
    """Largest batch tile that keeps rows = TB*S_pad bounded and >= 2 batch tiles
    on the "parallel" grid axis (so both v7x TensorCores receive work)."""
    cands = [tb for tb in range(1, batch + 1)
             if batch % tb == 0 and tb * s_pad <= max_rows]
    if not cands:
        return 1
    multi = [tb for tb in cands if batch // tb >= 2]
    return max(multi) if multi else max(cands)


def transformer_embedder_forward(params, tokens, *, heads, dim_head, block_batch=None):
    """tokens: (B, S) int32 token ids. Returns (B, S, D) float32 embeddings."""
    B, S = tokens.shape
    D = params["tok_emb"].shape[1]
    depth = params["wqkv"].shape[0]
    inner = heads * dim_head
    assert params["wqkv"].shape[2] == 3 * inner
    ff = params["w1"].shape[2]

    S_pad = ((S + 7) // 8) * 8          # sublane-clean sequence length
    if block_batch is None:
        block_batch = _pick_block_batch(B, S_pad)
    TB = block_batch
    assert B % TB == 0, "block_batch must divide batch"

    # Token-embedding gather + positional add are XLA glue; pad extra rows with zeros.
    # TODO(synk): the gather could move in-kernel via PrefetchScalarGridSpec + row DMA.
    emb = jnp.take(params["tok_emb"], tokens, axis=0) + params["pos_emb"][:S]
    if S_pad != S:
        emb = jnp.pad(emb, ((0, 0), (0, S_pad - S), (0, 0)))

    # Generation-aware VMEM budget (v5e/v6e: 128 MiB -> ~112; v7x: 64 MiB -> ~56).
    try:
        vmem_cap = int(pltpu.get_tpu_info().vmem_capacity_bytes)
    except Exception:
        vmem_cap = 64 * 1024 * 1024     # conservative fallback (v7x per-core VMEM)
    vmem_limit = max(32 * 1024 * 1024, min(vmem_cap * 7 // 8, 112 * 1024 * 1024))

    # At production sizes (D=1280, ff=5120) double-buffered bf16 FF weights (~52 MB)
    # overflow v7x's VMEM: drop W1/W2 to single buffering there; keep the (smaller)
    # attention weights fully double-buffered/prefetched.
    # TODO(synk): stream W1/W2 over the ff dimension (pltpu.emit_pipeline) to regain
    #             FF-weight prefetch on VMEM-constrained chips instead of Buffered(1).
    ffw_bytes = 2 * D * ff * params["w1"].dtype.itemsize      # W1 + W2 per layer
    ff_pipe = {}
    if 2 * ffw_bytes > vmem_limit // 2:
        ff_pipe = dict(pipeline_mode=pl.Buffered(1))

    kernel = functools.partial(fused_transformer_kernel,
                               num_heads=heads, dim_head=dim_head, seq_len=S)

    batch_map = lambda b, l: (b, 0, 0)   # activation: follow batch tile, carry over depth
    layer_map = lambda b, l: (l, 0, 0)   # stacked per-layer params: follow depth

    z = pl.pallas_call(
        kernel,
        out_shape=jax.ShapeDtypeStruct((B, S_pad, D), jnp.float32),
        grid=(B // TB, depth),
        in_specs=[
            pl.BlockSpec((TB, S_pad, D), batch_map),         # tok+pos embeddings (layer 0)
            pl.BlockSpec((1, 6, D), layer_map),              # [ln1_g,ln1_b,ln2_g,ln2_b,bo,b2]
            pl.BlockSpec((1, D, 3 * inner), layer_map),      # fused Wqkv (bf16, scale in Wq)
            pl.BlockSpec((1, inner, D), layer_map),          # Wo (bf16)
            pl.BlockSpec((1, D, ff), layer_map, **ff_pipe),  # W1 (bf16)
            pl.BlockSpec((1, 1, ff), layer_map),             # b1
            pl.BlockSpec((1, ff, D), layer_map, **ff_pipe),  # W2 (bf16)
            pl.BlockSpec((2, D), lambda b, l: (0, 0)),       # final LayerNorm gamma/beta
        ],
        out_specs=pl.BlockSpec((TB, S_pad, D), batch_map),
        compiler_params=pltpu.CompilerParams(
            dimension_semantics=("parallel", "arbitrary"),
            vmem_limit_bytes=vmem_limit),
    )(emb, params["vecs"], params["wqkv"], params["wo"],
      params["w1"], params["b1"], params["w2"], params["final_ln"])

    return z[:, :S, :] if S_pad != S else z


# ---------------------------------------------------------------------------
# Parameters
# ---------------------------------------------------------------------------
def init_params(key, *, vocab, max_seq_len, dim, depth, heads, dim_head, ff_mult):
    inner = heads * dim_head
    ff = dim * ff_mult
    keys = jax.random.split(key, 8)

    def nrm(k, shape, std):
        return jax.random.normal(k, shape, jnp.float32) * std

    wdt = jnp.bfloat16  # MXU weight dtype; accumulation / residuals stay f32

    # Fused QKV weight; the 1/sqrt(dim_head) attention scale is folded into Wq.
    wq = nrm(keys[2], (depth, dim, inner), dim ** -0.5) * (dim_head ** -0.5)
    wk = nrm(keys[3], (depth, dim, inner), dim ** -0.5)
    wv = nrm(keys[4], (depth, dim, inner), dim ** -0.5)
    wqkv = jnp.concatenate([wq, wk, wv], axis=-1).astype(wdt)   # (depth, D, 3*inner)

    # Packed per-layer small vectors: [ln1_g, ln1_b, ln2_g, ln2_b, bo, b2].
    vecs = jnp.stack(
        [jnp.ones((depth, dim)), jnp.zeros((depth, dim)),
         jnp.ones((depth, dim)), jnp.zeros((depth, dim)),
         jnp.zeros((depth, dim)), jnp.zeros((depth, dim))],
        axis=1).astype(jnp.float32)                             # (depth, 6, dim)

    return {
        "tok_emb": nrm(keys[0], (vocab, dim), 0.02),
        "pos_emb": nrm(keys[1], (max_seq_len, dim), 0.02),
        "final_ln": jnp.concatenate(
            [jnp.ones((1, dim)), jnp.zeros((1, dim))], axis=0).astype(jnp.float32),
        "vecs": vecs,
        "wqkv": wqkv,
        "wo": nrm(keys[5], (depth, inner, dim), inner ** -0.5).astype(wdt),
        "w1": nrm(keys[6], (depth, dim, ff), dim ** -0.5).astype(wdt),
        "b1": jnp.zeros((depth, 1, ff), jnp.float32),
        "w2": nrm(keys[7], (depth, ff, dim), ff ** -0.5).astype(wdt),
    }


if __name__ == "__main__":
    # Small synthetic config (structure identical to BERTEmbedder defaults):
    # n_embed=32, n_layer=2, vocab_size=100, max_seq_len=77, heads=4, dim_head=8, ff mult 4.
    B, S = 4, 8
    VOCAB, MAX_SEQ_LEN = 100, 77
    DIM, DEPTH = 32, 2
    HEADS, DIM_HEAD, FF_MULT = 4, 8, 4

    key = jax.random.PRNGKey(0)
    pkey, tkey = jax.random.split(key)
    params = init_params(pkey, vocab=VOCAB, max_seq_len=MAX_SEQ_LEN, dim=DIM,
                         depth=DEPTH, heads=HEADS, dim_head=DIM_HEAD, ff_mult=FF_MULT)
    tokens = jax.random.randint(tkey, (B, S), 0, VOCAB, dtype=jnp.int32)

    fwd = jax.jit(functools.partial(transformer_embedder_forward,
                                    heads=HEADS, dim_head=DIM_HEAD))
    z = jax.block_until_ready(fwd(params, tokens))
    assert z.shape == (B, S, DIM) and z.dtype == jnp.float32
    assert bool(jnp.all(jnp.isfinite(z)))
    print("KERNEL_OK")
</pallas_src>

<mosaic_0001>
module attributes {stable_mosaic.version = 11 : i64} {
  func.func @fused_transformer_kernel(%arg0: i32, %arg1: i32, %arg2: memref<2x8x32xf32, #tpu.memory_space<vmem>>, %arg3: memref<1x6x32xf32, #tpu.memory_space<vmem>>, %arg4: memref<1x32x96xbf16, #tpu.memory_space<vmem>>, %arg5: memref<1x32x32xbf16, #tpu.memory_space<vmem>>, %arg6: memref<1x32x128xbf16, #tpu.memory_space<vmem>>, %arg7: memref<1x1x128xf32, #tpu.memory_space<vmem>>, %arg8: memref<1x128x32xbf16, #tpu.memory_space<vmem>>, %arg9: memref<2x32xf32, #tpu.memory_space<vmem>>, %arg10: memref<2x8x32xf32, #tpu.memory_space<vmem>>) attributes {dimension_semantics = [#tpu.dimension_semantics<parallel>, #tpu.dimension_semantics<arbitrary>], iteration_bounds = array<i64: 2, 2>, scalar_prefetch = 0 : i64, scratch_operands = 0 : i64, tpu.core_type = #tpu.core_type<tc>, window_params = [{transform_indices = @transform_0, window_bounds = array<i64: 2, 8, 32>}, {transform_indices = @transform_1, window_bounds = array<i64: 1, 6, 32>}, {transform_indices = @transform_2, window_bounds = array<i64: 1, 32, 96>}, {transform_indices = @transform_3, window_bounds = array<i64: 1, 32, 32>}, {transform_indices = @transform_4, window_bounds = array<i64: 1, 32, 128>}, {transform_indices = @transform_5, window_bounds = array<i64: 1, 1, 128>}, {transform_indices = @transform_6, window_bounds = array<i64: 1, 128, 32>}, {pipeline_mode = #tpu.pipeline_mode<synchronous>, transform_indices = @transform_7, window_bounds = array<i64: 2, 32>}, {transform_indices = @transform_8, window_bounds = array<i64: 2, 8, 32>}]} {
    %c0_i32 = arith.constant 0 : i32
    %0 = arith.cmpi eq, %arg1, %c0_i32 : i32
    %1 = arith.extui %0 : i1 to i32
    %c0_i32_0 = arith.constant 0 : i32
    %2 = arith.cmpi ne, %1, %c0_i32_0 : i32
    scf.if %2 {
      %c0_56 = arith.constant 0 : index
      %c0_57 = arith.constant 0 : index
      %c0_58 = arith.constant 0 : index
      %165 = vector.load %arg2[%c0_56, %c0_57, %c0_58] : memref<2x8x32xf32, #tpu.memory_space<vmem>>, vector<2x8x32xf32>
      %c0_59 = arith.constant 0 : index
      %c0_60 = arith.constant 0 : index
      %c0_61 = arith.constant 0 : index
      %166 = vector.load %arg10[%c0_59, %c0_60, %c0_61] : memref<2x8x32xf32, #tpu.memory_space<vmem>>, vector<2x8x32xf32>
      tpu.vector_store %arg10[%c0_59, %c0_60, %c0_61], %165 {strides = array<i32>} : memref<2x8x32xf32, #tpu.memory_space<vmem>>, vector<2x8x32xf32>,
    } else {
    }
    %c0 = arith.constant 0 : index
    %c0_1 = arith.constant 0 : index
    %c0_2 = arith.constant 0 : index
    %3 = vector.load %arg10[%c0, %c0_1, %c0_2] : memref<2x8x32xf32, #tpu.memory_space<vmem>>, vector<2x8x32xf32>
    %4 = vector.shape_cast %3 : vector<2x8x32xf32> to vector<16x32xf32>
    %c0_3 = arith.constant 0 : index
    %c0_4 = arith.constant 0 : index
    %c0_5 = arith.constant 0 : index
    %5 = vector.load %arg3[%c0_3, %c0_4, %c0_5] : memref<1x6x32xf32, #tpu.memory_space<vmem>>, vector<1x6x32xf32>
    %6 = vector.shape_cast %5 : vector<1x6x32xf32> to vector<6x32xf32>
    %7 = vector.extract_strided_slice %6 {offsets = [0, 0], sizes = [1, 32], strides = [1, 1]} : vector<6x32xf32> to vector<1x32xf32>
    %8 = vector.extract_strided_slice %6 {offsets = [1, 0], sizes = [1, 32], strides = [1, 1]} : vector<6x32xf32> to vector<1x32xf32>
    %9 = vector.extract_strided_slice %6 {offsets = [2, 0], sizes = [1, 32], strides = [1, 1]} : vector<6x32xf32> to vector<1x32xf32>
    %10 = vector.extract_strided_slice %6 {offsets = [3, 0], sizes = [1, 32], strides = [1, 1]} : vector<6x32xf32> to vector<1x32xf32>
    %11 = vector.extract_strided_slice %6 {offsets = [4, 0], sizes = [1, 32], strides = [1, 1]} : vector<6x32xf32> to vector<1x32xf32>
    %12 = vector.extract_strided_slice %6 {offsets = [5, 0], sizes = [1, 32], strides = [1, 1]} : vector<6x32xf32> to vector<1x32xf32>
    %cst = arith.constant dense<0.000000e+00> : vector<16xf32>
    %13 = vector.multi_reduction <add>, %4, %cst [1] : vector<16x32xf32> to vector<16xf32>
    %14 = vector.shape_cast %13 : vector<16xf32> to vector<16x1xf32>
    %cst_6 = arith.constant 3.200000e+01 : f32
    %15 = vector.broadcast %cst_6 : f32 to vector<16x1xf32>
    %16 = arith.divf %14, %15 : vector<16x1xf32>
    %17 = vector.broadcast %16 : vector<16x1xf32> to vector<16x32xf32>
    %18 = arith.subf %4, %17 : vector<16x32xf32>
    %19 = arith.mulf %18, %18 : vector<16x32xf32>
    %cst_7 = arith.constant dense<0.000000e+00> : vector<16xf32>
    %20 = vector.multi_reduction <add>, %19, %cst_7 [1] : vector<16x32xf32> to vector<16xf32>
    %21 = vector.shape_cast %20 : vector<16xf32> to vector<16x1xf32>
    %cst_8 = arith.constant 3.200000e+01 : f32
    %22 = vector.broadcast %cst_8 : f32 to vector<16x1xf32>
    %23 = arith.divf %21, %22 : vector<16x1xf32>
    %24 = vector.broadcast %16 : vector<16x1xf32> to vector<16x32xf32>
    %25 = arith.subf %4, %24 : vector<16x32xf32>
    %cst_9 = arith.constant 9.99999974E-6 : f32
    %26 = vector.broadcast %cst_9 : f32 to vector<16x1xf32>
    %27 = arith.addf %23, %26 : vector<16x1xf32>
    %28 = math.rsqrt %27 : vector<16x1xf32>
    %29 = vector.broadcast %28 : vector<16x1xf32> to vector<16x32xf32>
    %30 = arith.mulf %25, %29 : vector<16x32xf32>
    %31 = vector.broadcast %7 : vector<1x32xf32> to vector<16x32xf32>
    %32 = arith.mulf %30, %31 : vector<16x32xf32>
    %33 = vector.broadcast %8 : vector<1x32xf32> to vector<16x32xf32>
    %34 = arith.addf %32, %33 : vector<16x32xf32>
    %35 = arith.truncf %34 : vector<16x32xf32> to vector<16x32xbf16>
    %c0_10 = arith.constant 0 : index
    %c0_11 = arith.constant 0 : index
    %c0_12 = arith.constant 0 : index
    %36 = vector.load %arg4[%c0_10, %c0_11, %c0_12] : memref<1x32x96xbf16, #tpu.memory_space<vmem>>, vector<1x32x96xbf16>
    %37 = vector.shape_cast %36 : vector<1x32x96xbf16> to vector<32x96xbf16>
    %cst_13 = arith.constant dense<0.000000e+00> : vector<16x96xf32>
    %38 = tpu.matmul %35, %37, %cst_13 {dimension_numbers = #tpu.dot_dimension_numbers<[1], [0], [0], [1], [0, 0, 1, 1], [], []>} : vector<16x32xbf16>, vector<32x96xbf16>, vector<16x96xf32> -> vector<16x96xf32>
    %39 = arith.truncf %38 : vector<16x96xf32> to vector<16x96xbf16>
    %40 = vector.shape_cast %39 : vector<16x96xbf16> to vector<2x8x96xbf16>
    %41 = vector.extract_strided_slice %40 {offsets = [0, 0, 0], sizes = [2, 8, 8], strides = [1, 1, 1]} : vector<2x8x96xbf16> to vector<2x8x8xbf16>
    %42 = vector.extract_strided_slice %40 {offsets = [0, 0, 32], sizes = [2, 8, 8], strides = [1, 1, 1]} : vector<2x8x96xbf16> to vector<2x8x8xbf16>
    %43 = vector.extract_strided_slice %40 {offsets = [0, 0, 64], sizes = [2, 8, 8], strides = [1, 1, 1]} : vector<2x8x96xbf16> to vector<2x8x8xbf16>
    "tpu.trace_start"() <{level = 10 : i32, message = "bqd,bkd->bqk"}> : () -> ()
    %cst_14 = arith.constant dense<0.000000e+00> : vector<2x8x8xf32>
    %44 = tpu.matmul %41, %42, %cst_14 {dimension_numbers = #tpu.dot_dimension_numbers<[2], [2], [1], [1], [0, 0, 0, 1, 1, 1], [0], [0]>} : vector<2x8x8xbf16>, vector<2x8x8xbf16>, vector<2x8x8xf32> -> vector<2x8x8xf32>
    "tpu.trace_stop"() : () -> ()
    %cst_15 = arith.constant dense<0xFF800000> : vector<2x8xf32>
    %45 = vector.multi_reduction <maximumf>, %44, %cst_15 [2] : vector<2x8x8xf32> to vector<2x8xf32>
    %46 = vector.shape_cast %45 : vector<2x8xf32> to vector<2x8x1xf32>
    %47 = vector.broadcast %46 : vector<2x8x1xf32> to vector<2x8x8xf32>
    %48 = arith.subf %44, %47 : vector<2x8x8xf32>
    %49 = math.exp %48 : vector<2x8x8xf32>
    %cst_16 = arith.constant dense<0.000000e+00> : vector<2x8xf32>
    %50 = vector.multi_reduction <add>, %49, %cst_16 [2] : vector<2x8x8xf32> to vector<2x8xf32>
    %51 = vector.shape_cast %50 : vector<2x8xf32> to vector<2x8x1xf32>
    %52 = tpu.reciprocal %51 : vector<2x8x1xf32> -> vector<2x8x1xf32>
    %53 = vector.broadcast %52 : vector<2x8x1xf32> to vector<2x8x8xf32>
    %54 = arith.mulf %49, %53 : vector<2x8x8xf32>
    %55 = arith.truncf %54 : vector<2x8x8xf32> to vector<2x8x8xbf16>
    "tpu.trace_start"() <{level = 10 : i32, message = "bqk,bkd->bqd"}> : () -> ()
    %cst_17 = arith.constant dense<0.000000e+00> : vector<2x8x8xf32>
    %56 = tpu.matmul %55, %43, %cst_17 {dimension_numbers = #tpu.dot_dimension_numbers<[2], [1], [1], [2], [0, 0, 0, 1, 1, 2], [0], [0]>} : vector<2x8x8xbf16>, vector<2x8x8xbf16>, vector<2x8x8xf32> -> vector<2x8x8xf32>
    "tpu.trace_stop"() : () -> ()
    %57 = vector.extract_strided_slice %40 {offsets = [0, 0, 8], sizes = [2, 8, 8], strides = [1, 1, 1]} : vector<2x8x96xbf16> to vector<2x8x8xbf16>
    %58 = vector.extract_strided_slice %40 {offsets = [0, 0, 40], sizes = [2, 8, 8], strides = [1, 1, 1]} : vector<2x8x96xbf16> to vector<2x8x8xbf16>
    %59 = vector.extract_strided_slice %40 {offsets = [0, 0, 72], sizes = [2, 8, 8], strides = [1, 1, 1]} : vector<2x8x96xbf16> to vector<2x8x8xbf16>
    "tpu.trace_start"() <{level = 10 : i32, message = "bqd,bkd->bqk"}> : () -> ()
    %cst_18 = arith.constant dense<0.000000e+00> : vector<2x8x8xf32>
    %60 = tpu.matmul %57, %58, %cst_18 {dimension_numbers = #tpu.dot_dimension_numbers<[2], [2], [1], [1], [0, 0, 0, 1, 1, 1], [0], [0]>} : vector<2x8x8xbf16>, vector<2x8x8xbf16>, vector<2x8x8xf32> -> vector<2x8x8xf32>
    "tpu.trace_stop"() : () -> ()
    %cst_19 = arith.constant dense<0xFF800000> : vector<2x8xf32>
    %61 = vector.multi_reduction <maximumf>, %60, %cst_19 [2] : vector<2x8x8xf32> to vector<2x8xf32>
    %62 = vector.shape_cast %61 : vector<2x8xf32> to vector<2x8x1xf32>
    %63 = vector.broadcast %62 : vector<2x8x1xf32> to vector<2x8x8xf32>
    %64 = arith.subf %60, %63 : vector<2x8x8xf32>
    %65 = math.exp %64 : vector<2x8x8xf32>
    %cst_20 = arith.constant dense<0.000000e+00> : vector<2x8xf32>
    %66 = vector.multi_reduction <add>, %65, %cst_20 [2] : vector<2x8x8xf32> to vector<2x8xf32>
    %67 = vector.shape_cast %66 : vector<2x8xf32> to vector<2x8x1xf32>
    %68 = tpu.reciprocal %67 : vector<2x8x1xf32> -> vector<2x8x1xf32>
    %69 = vector.broadcast %68 : vector<2x8x1xf32> to vector<2x8x8xf32>
    %70 = arith.mulf %65, %69 : vector<2x8x8xf32>
    %71 = arith.truncf %70 : vector<2x8x8xf32> to vector<2x8x8xbf16>
    "tpu.trace_start"() <{level = 10 : i32, message = "bqk,bkd->bqd"}> : () -> ()
    %cst_21 = arith.constant dense<0.000000e+00> : vector<2x8x8xf32>
    %72 = tpu.matmul %71, %59, %cst_21 {dimension_numbers = #tpu.dot_dimension_numbers<[2], [1], [1], [2], [0, 0, 0, 1, 1, 2], [0], [0]>} : vector<2x8x8xbf16>, vector<2x8x8xbf16>, vector<2x8x8xf32> -> vector<2x8x8xf32>
    "tpu.trace_stop"() : () -> ()
    %73 = vector.extract_strided_slice %40 {offsets = [0, 0, 16], sizes = [2, 8, 8], strides = [1, 1, 1]} : vector<2x8x96xbf16> to vector<2x8x8xbf16>
    %74 = vector.extract_strided_slice %40 {offsets = [0, 0, 48], sizes = [2, 8, 8], strides = [1, 1, 1]} : vector<2x8x96xbf16> to vector<2x8x8xbf16>
    %75 = vector.extract_strided_slice %40 {offsets = [0, 0, 80], sizes = [2, 8, 8], strides = [1, 1, 1]} : vector<2x8x96xbf16> to vector<2x8x8xbf16>
    "tpu.trace_start"() <{level = 10 : i32, message = "bqd,bkd->bqk"}> : () -> ()
    %cst_22 = arith.constant dense<0.000000e+00> : vector<2x8x8xf32>
    %76 = tpu.matmul %73, %74, %cst_22 {dimension_numbers = #tpu.dot_dimension_numbers<[2], [2], [1], [1], [0, 0, 0, 1, 1, 1], [0], [0]>} : vector<2x8x8xbf16>, vector<2x8x8xbf16>, vector<2x8x8xf32> -> vector<2x8x8xf32>
    "tpu.trace_stop"() : () -> ()
    %cst_23 = arith.constant dense<0xFF800000> : vector<2x8xf32>
    %77 = vector.multi_reduction <maximumf>, %76, %cst_23 [2] : vector<2x8x8xf32> to vector<2x8xf32>
    %78 = vector.shape_cast %77 : vector<2x8xf32> to vector<2x8x1xf32>
    %79 = vector.broadcast %78 : vector<2x8x1xf32> to vector<2x8x8xf32>
    %80 = arith.subf %76, %79 : vector<2x8x8xf32>
    %81 = math.exp %80 : vector<2x8x8xf32>
    %cst_24 = arith.constant dense<0.000000e+00> : vector<2x8xf32>
    %82 = vector.multi_reduction <add>, %81, %cst_24 [2] : vector<2x8x8xf32> to vector<2x8xf32>
    %83 = vector.shape_cast %82 : vector<2x8xf32> to vector<2x8x1xf32>
    %84 = tpu.reciprocal %83 : vector<2x8x1xf32> -> vector<2x8x1xf32>
    %85 = vector.broadcast %84 : vector<2x8x1xf32> to vector<2x8x8xf32>
    %86 = arith.mulf %81, %85 : vector<2x8x8xf32>
    %87 = arith.truncf %86 : vector<2x8x8xf32> to vector<2x8x8xbf16>
    "tpu.trace_start"() <{level = 10 : i32, message = "bqk,bkd->bqd"}> : () -> ()
    %cst_25 = arith.constant dense<0.000000e+00> : vector<2x8x8xf32>
    %88 = tpu.matmul %87, %75, %cst_25 {dimension_numbers = #tpu.dot_dimension_numbers<[2], [1], [1], [2], [0, 0, 0, 1, 1, 2], [0], [0]>} : vector<2x8x8xbf16>, vector<2x8x8xbf16>, vector<2x8x8xf32> -> vector<2x8x8xf32>
    "tpu.trace_stop"() : () -> ()
    %89 = vector.extract_strided_slice %40 {offsets = [0, 0, 24], sizes = [2, 8, 8], strides = [1, 1, 1]} : vector<2x8x96xbf16> to vector<2x8x8xbf16>
    %90 = vector.extract_strided_slice %40 {offsets = [0, 0, 56], sizes = [2, 8, 8], strides = [1, 1, 1]} : vector<2x8x96xbf16> to vector<2x8x8xbf16>
    %91 = vector.extract_strided_slice %40 {offsets = [0, 0, 88], sizes = [2, 8, 8], strides = [1, 1, 1]} : vector<2x8x96xbf16> to vector<2x8x8xbf16>
    "tpu.trace_start"() <{level = 10 : i32, message = "bqd,bkd->bqk"}> : () -> ()
    %cst_26 = arith.constant dense<0.000000e+00> : vector<2x8x8xf32>
    %92 = tpu.matmul %89, %90, %cst_26 {dimension_numbers = #tpu.dot_dimension_numbers<[2], [2], [1], [1], [0, 0, 0, 1, 1, 1], [0], [0]>} : vector<2x8x8xbf16>, vector<2x8x8xbf16>, vector<2x8x8xf32> -> vector<2x8x8xf32>
    "tpu.trace_stop"() : () -> ()
    %cst_27 = arith.constant dense<0xFF800000> : vector<2x8xf32>
    %93 = vector.multi_reduction <maximumf>, %92, %cst_27 [2] : vector<2x8x8xf32> to vector<2x8xf32>
    %94 = vector.shape_cast %93 : vector<2x8xf32> to vector<2x8x1xf32>
    %95 = vector.broadcast %94 : vector<2x8x1xf32> to vector<2x8x8xf32>
    %96 = arith.subf %92, %95 : vector<2x8x8xf32>
    %97 = math.exp %96 : vector<2x8x8xf32>
    %cst_28 = arith.constant dense<0.000000e+00> : vector<2x8xf32>
    %98 = vector.multi_reduction <add>, %97, %cst_28 [2] : vector<2x8x8xf32> to vector<2x8xf32>
    %99 = vector.shape_cast %98 : vector<2x8xf32> to vector<2x8x1xf32>
    %100 = tpu.reciprocal %99 : vector<2x8x1xf32> -> vector<2x8x1xf32>
    %101 = vector.broadcast %100 : vector<2x8x1xf32> to vector<2x8x8xf32>
    %102 = arith.mulf %97, %101 : vector<2x8x8xf32>
    %103 = arith.truncf %102 : vector<2x8x8xf32> to vector<2x8x8xbf16>
    "tpu.trace_start"() <{level = 10 : i32, message = "bqk,bkd->bqd"}> : () -> ()
    %cst_29 = arith.constant dense<0.000000e+00> : vector<2x8x8xf32>
    %104 = tpu.matmul %103, %91, %cst_29 {dimension_numbers = #tpu.dot_dimension_numbers<[2], [1], [1], [2], [0, 0, 0, 1, 1, 2], [0], [0]>} : vector<2x8x8xbf16>, vector<2x8x8xbf16>, vector<2x8x8xf32> -> vector<2x8x8xf32>
    "tpu.trace_stop"() : () -> ()
    %105 = tpu.concatenate %56, %72, %88, %104 in 2 : vector<2x8x8xf32>, vector<2x8x8xf32>, vector<2x8x8xf32>, vector<2x8x8xf32> -> vector<2x8x32xf32>
    %106 = vector.shape_cast %105 : vector<2x8x32xf32> to vector<16x32xf32>
    %107 = arith.truncf %106 : vector<16x32xf32> to vector<16x32xbf16>
    %c0_30 = arith.constant 0 : index
    %c0_31 = arith.constant 0 : index
    %c0_32 = arith.constant 0 : index
    %108 = vector.load %arg5[%c0_30, %c0_31, %c0_32] : memref<1x32x32xbf16, #tpu.memory_space<vmem>>, vector<1x32x32xbf16>
    %109 = vector.shape_cast %108 : vector<1x32x32xbf16> to vector<32x32xbf16>
    %cst_33 = arith.constant dense<0.000000e+00> : vector<16x32xf32>
    %110 = tpu.matmul %107, %109, %cst_33 {dimension_numbers = #tpu.dot_dimension_numbers<[1], [0], [0], [1], [0, 0, 1, 1], [], []>} : vector<16x32xbf16>, vector<32x32xbf16>, vector<16x32xf32> -> vector<16x32xf32>
    %111 = vector.broadcast %11 : vector<1x32xf32> to vector<16x32xf32>
    %112 = arith.addf %110, %111 : vector<16x32xf32>
    %113 = arith.addf %4, %112 : vector<16x32xf32>
    %cst_34 = arith.constant dense<0.000000e+00> : vector<16xf32>
    %114 = vector.multi_reduction <add>, %113, %cst_34 [1] : vector<16x32xf32> to vector<16xf32>
    %115 = vector.shape_cast %114 : vector<16xf32> to vector<16x1xf32>
    %cst_35 = arith.constant 3.200000e+01 : f32
    %116 = vector.broadcast %cst_35 : f32 to vector<16x1xf32>
    %117 = arith.divf %115, %116 : vector<16x1xf32>
    %118 = vector.broadcast %117 : vector<16x1xf32> to vector<16x32xf32>
    %119 = arith.subf %113, %118 : vector<16x32xf32>
    %120 = arith.mulf %119, %119 : vector<16x32xf32>
    %cst_36 = arith.constant dense<0.000000e+00> : vector<16xf32>
    %121 = vector.multi_reduction <add>, %120, %cst_36 [1] : vector<16x32xf32> to vector<16xf32>
    %122 = vector.shape_cast %121 : vector<16xf32> to vector<16x1xf32>
    %cst_37 = arith.constant 3.200000e+01 : f32
    %123 = vector.broadcast %cst_37 : f32 to vector<16x1xf32>
    %124 = arith.divf %122, %123 : vector<16x1xf32>
    %125 = vector.broadcast %117 : vector<16x1xf32> to vector<16x32xf32>
    %126 = arith.subf %113, %125 : vector<16x32xf32>
    %cst_38 = arith.constant 9.99999974E-6 : f32
    %127 = vector.broadcast %cst_38 : f32 to vector<16x1xf32>
    %128 = arith.addf %124, %127 : vector<16x1xf32>
    %129 = math.rsqrt %128 : vector<16x1xf32>
    %130 = vector.broadcast %129 : vector<16x1xf32> to vector<16x32xf32>
    %131 = arith.mulf %126, %130 : vector<16x32xf32>
    %132 = vector.broadcast %9 : vector<1x32xf32> to vector<16x32xf32>
    %133 = arith.mulf %131, %132 : vector<16x32xf32>
    %134 = vector.broadcast %10 : vector<1x32xf32> to vector<16x32xf32>
    %135 = arith.addf %133, %134 : vector<16x32xf32>
    %136 = arith.truncf %135 : vector<16x32xf32> to vector<16x32xbf16>
    %c0_39 = arith.constant 0 : index
    %c0_40 = arith.constant 0 : index
    %c0_41 = arith.constant 0 : index
    %137 = vector.load %arg6[%c0_39, %c0_40, %c0_41] : memref<1x32x128xbf16, #tpu.memory_space<vmem>>, vector<1x32x128xbf16>
    %138 = vector.shape_cast %137 : vector<1x32x128xbf16> to vector<32x128xbf16>
    %cst_42 = arith.constant dense<0.000000e+00> : vector<16x128xf32>
    %139 = tpu.matmul %136, %138, %cst_42 {dimension_numbers = #tpu.dot_dimension_numbers<[1], [0], [0], [1], [0, 0, 1, 1], [], []>} : vector<16x32xbf16>, vector<32x128xbf16>, vector<16x128xf32> -> vector<16x128xf32>
    %c0_43 = arith.constant 0 : index
    %c0_44 = arith.constant 0 : index
    %c0_45 = arith.constant 0 : index
    %140 = vector.load %arg7[%c0_43, %c0_44, %c0_45] : memref<1x1x128xf32, #tpu.memory_space<vmem>>, vector<1x1x128xf32>
    %141 = vector.shape_cast %140 : vector<1x1x128xf32> to vector<1x128xf32>
    %142 = vector.broadcast %141 : vector<1x128xf32> to vector<16x128xf32>
    %143 = arith.addf %139, %142 : vector<16x128xf32>
    %cst_46 = arith.constant 5.000000e-01 : f32
    %144 = vector.broadcast %cst_46 : f32 to vector<16x128xf32>
    %145 = arith.mulf %144, %143 : vector<16x128xf32>
    %cst_47 = arith.constant 0.707106769 : f32
    %146 = vector.broadcast %cst_47 : f32 to vector<16x128xf32>
    %147 = arith.mulf %143, %146 : vector<16x128xf32>
    %148 = math.erf %147 : vector<16x128xf32>
    %cst_48 = arith.constant 1.000000e+00 : f32
    %149 = vector.broadcast %cst_48 : f32 to vector<16x128xf32>
    %150 = arith.addf %149, %148 : vector<16x128xf32>
    %151 = arith.mulf %145, %150 : vector<16x128xf32>
    %152 = arith.truncf %151 : vector<16x128xf32> to vector<16x128xbf16>
    %c0_49 = arith.constant 0 : index
    %c0_50 = arith.constant 0 : index
    %c0_51 = arith.constant 0 : index
    %153 = vector.load %arg8[%c0_49, %c0_50, %c0_51] : memref<1x128x32xbf16, #tpu.memory_space<vmem>>, vector<1x128x32xbf16>
    %154 = vector.shape_cast %153 : vector<1x128x32xbf16> to vector<128x32xbf16>
    %cst_52 = arith.constant dense<0.000000e+00> : vector<16x32xf32>
    %155 = tpu.matmul %152, %154, %cst_52 {dimension_numbers = #tpu.dot_dimension_numbers<[1], [0], [0], [1], [0, 0, 1, 1], [], []>} : vector<16x128xbf16>, vector<128x32xbf16>, vector<16x32xf32> -> vector<16x32xf32>
    %156 = arith.addf %113, %155 : vector<16x32xf32>
    %157 = vector.broadcast %12 : vector<1x32xf32> to vector<16x32xf32>
    %158 = arith.addf %156, %157 : vector<16x32xf32>
    %c1_i32 = arith.constant 1 : i32
    %159 = arith.cmpi slt, %arg1, %c1_i32 : i32
    %160 = arith.extui %159 : i1 to i32
    %c0_i32_53 = arith.constant 0 : i32
    %161 = arith.cmpi ne, %160, %c0_i32_53 : i32
    scf.if %161 {
      %165 = vector.shape_cast %158 : vector<16x32xf32> to vector<2x8x32xf32>
      %c0_56 = arith.constant 0 : index
      %c0_57 = arith.constant 0 : index
      %c0_58 = arith.constant 0 : index
      %166 = vector.load %arg10[%c0_56, %c0_57, %c0_58] : memref<2x8x32xf32, #tpu.memory_space<vmem>>, vector<2x8x32xf32>
      tpu.vector_store %arg10[%c0_56, %c0_57, %c0_58], %165 {strides = array<i32>} : memref<2x8x32xf32, #tpu.memory_space<vmem>>, vector<2x8x32xf32>,
    } else {
    }
    %c1_i32_54 = arith.constant 1 : i32
    %162 = arith.cmpi eq, %arg1, %c1_i32_54 : i32
    %163 = arith.extui %162 : i1 to i32
    %c0_i32_55 = arith.constant 0 : i32
    %164 = arith.cmpi ne, %163, %c0_i32_55 : i32
    scf.if %164 {
      %c0_56 = arith.constant 0 : index
      %c0_57 = arith.constant 0 : index
      %165 = vector.load %arg9[%c0_56, %c0_57] : memref<2x32xf32, #tpu.memory_space<vmem>>, vector<2x32xf32>
      %166 = vector.extract_strided_slice %165 {offsets = [0, 0], sizes = [1, 32], strides = [1, 1]} : vector<2x32xf32> to vector<1x32xf32>
      %167 = vector.extract_strided_slice %165 {offsets = [1, 0], sizes = [1, 32], strides = [1, 1]} : vector<2x32xf32> to vector<1x32xf32>
      %cst_58 = arith.constant dense<0.000000e+00> : vector<16xf32>
      %168 = vector.multi_reduction <add>, %158, %cst_58 [1] : vector<16x32xf32> to vector<16xf32>
      %169 = vector.shape_cast %168 : vector<16xf32> to vector<16x1xf32>
      %cst_59 = arith.constant 3.200000e+01 : f32
      %170 = vector.broadcast %cst_59 : f32 to vector<16x1xf32>
      %171 = arith.divf %169, %170 : vector<16x1xf32>
      %172 = vector.broadcast %171 : vector<16x1xf32> to vector<16x32xf32>
      %173 = arith.subf %158, %172 : vector<16x32xf32>
      %174 = arith.mulf %173, %173 : vector<16x32xf32>
      %cst_60 = arith.constant dense<0.000000e+00> : vector<16xf32>
      %175 = vector.multi_reduction <add>, %174, %cst_60 [1] : vector<16x32xf32> to vector<16xf32>
      %176 = vector.shape_cast %175 : vector<16xf32> to vector<16x1xf32>
      %cst_61 = arith.constant 3.200000e+01 : f32
      %177 = vector.broadcast %cst_61 : f32 to vector<16x1xf32>
      %178 = arith.divf %176, %177 : vector<16x1xf32>
      %179 = vector.broadcast %171 : vector<16x1xf32> to vector<16x32xf32>
      %180 = arith.subf %158, %179 : vector<16x32xf32>
      %cst_62 = arith.constant 9.99999974E-6 : f32
      %181 = vector.broadcast %cst_62 : f32 to vector<16x1xf32>
      %182 = arith.addf %178, %181 : vector<16x1xf32>
      %183 = math.rsqrt %182 : vector<16x1xf32>
      %184 = vector.broadcast %183 : vector<16x1xf32> to vector<16x32xf32>
      %185 = arith.mulf %180, %184 : vector<16x32xf32>
      %186 = vector.broadcast %166 : vector<1x32xf32> to vector<16x32xf32>
      %187 = arith.mulf %185, %186 : vector<16x32xf32>
      %188 = vector.broadcast %167 : vector<1x32xf32> to vector<16x32xf32>
      %189 = arith.addf %187, %188 : vector<16x32xf32>
      %190 = vector.shape_cast %189 : vector<16x32xf32> to vector<2x8x32xf32>
      %c0_63 = arith.constant 0 : index
      %c0_64 = arith.constant 0 : index
      %c0_65 = arith.constant 0 : index
      %191 = vector.load %arg10[%c0_63, %c0_64, %c0_65] : memref<2x8x32xf32, #tpu.memory_space<vmem>>, vector<2x8x32xf32>
      tpu.vector_store %arg10[%c0_63, %c0_64, %c0_65], %190 {strides = array<i32>} : memref<2x8x32xf32, #tpu.memory_space<vmem>>, vector<2x8x32xf32>,
    } else {
    }
    return
  }
  func.func @transform_0(%arg0: i32, %arg1: i32) -> (i32, i32, i32) {
    %c0_i32 = arith.constant 0 : i32
    %c0_i32_0 = arith.constant 0 : i32
    %c0_i32_1 = arith.constant 0 : i32
    return %arg0, %c0_i32, %c0_i32_0 : i32, i32, i32
  }
  func.func @transform_1(%arg0: i32, %arg1: i32) -> (i32, i32, i32) {
    %c0_i32 = arith.constant 0 : i32
    %c0_i32_0 = arith.constant 0 : i32
    %c0_i32_1 = arith.constant 0 : i32
    return %arg1, %c0_i32, %c0_i32_0 : i32, i32, i32
  }
  func.func @transform_2(%arg0: i32, %arg1: i32) -> (i32, i32, i32) {
    %c0_i32 = arith.constant 0 : i32
    %c0_i32_0 = arith.constant 0 : i32
    %c0_i32_1 = arith.constant 0 : i32
    return %arg1, %c0_i32, %c0_i32_0 : i32, i32, i32
  }
  func.func @transform_3(%arg0: i32, %arg1: i32) -> (i32, i32, i32) {
    %c0_i32 = arith.constant 0 : i32
    %c0_i32_0 = arith.constant 0 : i32
    %c0_i32_1 = arith.constant 0 : i32
    return %arg1, %c0_i32, %c0_i32_0 : i32, i32, i32
  }
  func.func @transform_4(%arg0: i32, %arg1: i32) -> (i32, i32, i32) {
    %c0_i32 = arith.constant 0 : i32
    %c0_i32_0 = arith.constant 0 : i32
    %c0_i32_1 = arith.constant 0 : i32
    return %arg1, %c0_i32, %c0_i32_0 : i32, i32, i32
  }
  func.func @transform_5(%arg0: i32, %arg1: i32) -> (i32, i32, i32) {
    %c0_i32 = arith.constant 0 : i32
    %c0_i32_0 = arith.constant 0 : i32
    %c0_i32_1 = arith.constant 0 : i32
    return %arg1, %c0_i32, %c0_i32_0 : i32, i32, i32
  }
  func.func @transform_6(%arg0: i32, %arg1: i32) -> (i32, i32, i32) {
    %c0_i32 = arith.constant 0 : i32
    %c0_i32_0 = arith.constant 0 : i32
    %c0_i32_1 = arith.constant 0 : i32
    return %arg1, %c0_i32, %c0_i32_0 : i32, i32, i32
  }
  func.func @transform_7(%arg0: i32, %arg1: i32) -> (i32, i32) {
    %c0_i32 = arith.constant 0 : i32
    %c0_i32_0 = arith.constant 0 : i32
    %c0_i32_1 = arith.constant 0 : i32
    return %c0_i32, %c0_i32_0 : i32, i32
  }
  func.func @transform_8(%arg0: i32, %arg1: i32) -> (i32, i32, i32) {
    %c0_i32 = arith.constant 0 : i32
    %c0_i32_0 = arith.constant 0 : i32
    %c0_i32_1 = arith.constant 0 : i32
    return %arg0, %c0_i32, %c0_i32_0 : i32, i32, i32
  }
}

</mosaic_0001>

<llo_original>
// kernel: transformer_embedder_forward.1
$region0: #{transformer_embedder_forward.1}
  #allocation0 [shape = 'u32[]', space=smem, size = 0x4, offset = 0x4, fixed_abs, tag = 'smem constant byte address 0x4 - core index']
  #allocation1 [shape = 'u32[72,128]{1,0:T(1,128)}', space=vmem, size = 0x9000, scoped, tag = 'internal scratch']
  %s0 = inlined_call_operand.vmem [shape: f32[4,8,32], index: 0, kind: input, shape index: {}]
  %s1 = inlined_call_operand.vmem [shape: f32[2,6,32], index: 1, kind: input, shape index: {}]
  %s2 = inlined_call_operand.vmem [shape: bf16[2,32,96], index: 2, kind: input, shape index: {}]
  %s3 = inlined_call_operand.vmem [shape: bf16[2,32,32], index: 3, kind: input, shape index: {}]
  %s4 = inlined_call_operand.vmem [shape: bf16[2,32,128], index: 4, kind: input, shape index: {}]
  %s5 = inlined_call_operand.vmem [shape: f32[2,1,128], index: 5, kind: input, shape index: {}]
  %s6 = inlined_call_operand.vmem [shape: bf16[2,128,32], index: 6, kind: input, shape index: {}]
  %s7 = inlined_call_operand.vmem [shape: f32[2,32], index: 7, kind: input, shape index: {}]
  %s8 = inlined_call_operand.hbm [shape: f32[4,8,32], index: 8, kind: output, shape index: {}]
  %s9 = sld [smem:[#allocation0]]
  $region77: #{transformer_embedder_forward.1} parent=0
    _
  %s11 = ssub.s32 1, %s9
  %s12 = scalar_select 0, %s11, %s9
  $region1: #{transformer_embedder_forward.1} parent=0
    #allocation2 [shape = 'u8[16384]{0}', space=vmem, size = 0x4000, scoped, tag = 'output window, operand 0']
    #allocation3 [shape = 's32[2]{0}', space=sflag, size = 0x8, scoped, tag = 'scoped memory for transformer_embedder_forward.1']
    %13 = vsyncpa [#allocation3], 0
    %s14 = scalar_lea.sflag [#allocation3], 1
    %15 = vsyncpa %s14, 0
    loop: start=0, step=1, limit=6
    $region2: #{transformer_embedder_forward.1} parent=1 // loop_pre_header
      _
    $region3: #{transformer_embedder_forward.1} parent=1 // loop_header
      %s17 = sphi 0, %s21
      %p18 = scmp.ge.s32.totalorder %s17, 6
      %s24 = sphi 0, %s36
      %s25 = sphi 0, %s32
      %s26 = sphi 0, %s24
      %s27 = sphi 0, %s25
      %s28 = sphi 0, %s26
      %s29 = sphi 0, %s27
      %s39 = sphi 0, %s41
      %s42 = sphi 0, %s39
      %s43 = sphi 0, %s42
      %s59 = sphi 0, %s43
      %s65 = sphi 0, %s67
      %s68 = sphi 0, %s65
      %s69 = sphi 0, %s68
      %s85 = sphi 0, %s69
      %s91 = sphi 0, %s93
      %s94 = sphi 0, %s91
      %s95 = sphi 0, %s94
      %s111 = sphi 0, %s95
      %s117 = sphi 0, %s119
      %s120 = sphi 0, %s117
      %s121 = sphi 0, %s120
      %s137 = sphi 0, %s121
      %s143 = sphi 0, %s145
      %s146 = sphi 0, %s143
      %s147 = sphi 0, %s146
      %s163 = sphi 0, %s147
      %s169 = sphi 0, %s171
      %s172 = sphi 0, %s169
      %s173 = sphi 0, %s172
      %s189 = sphi 0, %s173
      %s195 = sphi 0, %s197
      %s198 = sphi 0, %s195
      %s199 = sphi 0, %s198
      %s215 = sphi 0, %s199
      %s219 = sphi 0, %s219
      %s221 = sphi 0, %s219
      %s222 = sphi 0, %s221
      %s236 = sphi 0, %s222
      %s242 = sphi 0, %s244
      %s245 = sphi 0, %s242
      %s246 = sphi 0, %s245
      %s262 = sphi 0, %s246
    $region4: #{transformer_embedder_forward.1} parent=1 // loop_header_branch
      %20 = sbr.rel (%p18) target = $region8
    $region5: #{transformer_embedder_forward.1} parent=1 // loop_body
      %s22 = ssub.s32 %s17, 1
      %s23 = ssub.s32 %s17, 2
      %s30 = sadd.s32 1, %s25
      %p31 = scmp.ge.s32.totalorder %s30, 2
      %s32 = scalar_select %p31, 0, %s30
      %s33 = sadd.s32 1, %s24
      %s34 = scalar_select %p31, %s33, %s24
      %p35 = scmp.ge.s32.totalorder %s34, 2
      %s36 = scalar_select %p35, 0, %s34
      %s37 = ssub.s32 %s24, %s36
      %p38 = scmp.eq.s32.totalorder %s37, 0
      %s40 = sadd.s32 %s39, 1
      %s41 = scalar_select %p38, %s39, %s40
      %p44 = pneg %p38
      %p45 = scmp.eq.s32.totalorder %s17, 3
      %p46 = por %p44, %p45
      %p47 = scmp.ne.s32.totalorder %s39, %s42
      %p48 = scmp.eq.s32.totalorder %s17, 0
      %p49 = por %p47, %p48
      %p50 = scmp.ne.s32.totalorder %s39, %s42
      %p51 = scmp.eq.s32.totalorder %s22, 3
      %p52 = por %p50, %p51
      %p53 = scmp.ne.s32.totalorder %s42, %s43
      %p54 = scmp.eq.s32.totalorder %s22, 0
      %p55 = por %p53, %p54
      %p56 = scmp.ne.s32.totalorder %s42, %s43
      %p57 = scmp.eq.s32.totalorder %s23, 3
      %p58 = por %p56, %p57
      %p60 = scmp.ne.s32.totalorder %s43, %s59
      %p61 = scmp.eq.s32.totalorder %s23, 0
      %p62 = por %p60, %p61
      %s63 = ssub.s32 %s25, %s32
      %p64 = scmp.eq.s32.totalorder %s63, 0
      %s66 = sadd.s32 %s65, 1
      %s67 = scalar_select %p64, %s65, %s66
      %p70 = pneg %p64
      %p71 = scmp.eq.s32.totalorder %s17, 3
      %p72 = por %p70, %p71
      %p73 = scmp.ne.s32.totalorder %s65, %s68
      %p74 = scmp.eq.s32.totalorder %s17, 0
      %p75 = por %p73, %p74
      %p76 = scmp.ne.s32.totalorder %s65, %s68
      %p77 = scmp.eq.s32.totalorder %s22, 3
      %p78 = por %p76, %p77
      %p79 = scmp.ne.s32.totalorder %s68, %s69
      %p80 = scmp.eq.s32.totalorder %s22, 0
      %p81 = por %p79, %p80
      %p82 = scmp.ne.s32.totalorder %s68, %s69
      %p83 = scmp.eq.s32.totalorder %s23, 3
      %p84 = por %p82, %p83
      %p86 = scmp.ne.s32.totalorder %s69, %s85
      %p87 = scmp.eq.s32.totalorder %s23, 0
      %p88 = por %p86, %p87
      %s89 = ssub.s32 %s25, %s32
      %p90 = scmp.eq.s32.totalorder %s89, 0
      %s92 = sadd.s32 %s91, 1
      %s93 = scalar_select %p90, %s91, %s92
      %p96 = pneg %p90
      %p97 = scmp.eq.s32.totalorder %s17, 3
      %p98 = por %p96, %p97
      %p99 = scmp.ne.s32.totalorder %s91, %s94
      %p100 = scmp.eq.s32.totalorder %s17, 0
      %p101 = por %p99, %p100
      %p102 = scmp.ne.s32.totalorder %s91, %s94
      %p103 = scmp.eq.s32.totalorder %s22, 3
      %p104 = por %p102, %p103
      %p105 = scmp.ne.s32.totalorder %s94, %s95
      %p106 = scmp.eq.s32.totalorder %s22, 0
      %p107 = por %p105, %p106
      %p108 = scmp.ne.s32.totalorder %s94, %s95
      %p109 = scmp.eq.s32.totalorder %s23, 3
      %p110 = por %p108, %p109
      %p112 = scmp.ne.s32.totalorder %s95, %s111
      %p113 = scmp.eq.s32.totalorder %s23, 0
      %p114 = por %p112, %p113
      %s115 = ssub.s32 %s25, %s32
      %p116 = scmp.eq.s32.totalorder %s115, 0
      %s118 = sadd.s32 %s117, 1
      %s119 = scalar_select %p116, %s117, %s118
      %p122 = pneg %p116
      %p123 = scmp.eq.s32.totalorder %s17, 3
      %p124 = por %p122, %p123
      %p125 = scmp.ne.s32.totalorder %s117, %s120
      %p126 = scmp.eq.s32.totalorder %s17, 0
      %p127 = por %p125, %p126
      %p128 = scmp.ne.s32.totalorder %s117, %s120
      %p129 = scmp.eq.s32.totalorder %s22, 3
      %p130 = por %p128, %p129
      %p131 = scmp.ne.s32.totalorder %s120, %s121
      %p132 = scmp.eq.s32.totalorder %s22, 0
      %p133 = por %p131, %p132
      %p134 = scmp.ne.s32.totalorder %s120, %s121
      %p135 = scmp.eq.s32.totalorder %s23, 3
      %p136 = por %p134, %p135
      %p138 = scmp.ne.s32.totalorder %s121, %s137
      %p139 = scmp.eq.s32.totalorder %s23, 0
      %p140 = por %p138, %p139
      %s141 = ssub.s32 %s25, %s32
      %p142 = scmp.eq.s32.totalorder %s141, 0
      %s144 = sadd.s32 %s143, 1
      %s145 = scalar_select %p142, %s143, %s144
      %p148 = pneg %p142
      %p149 = scmp.eq.s32.totalorder %s17, 3
      %p150 = por %p148, %p149
      %p151 = scmp.ne.s32.totalorder %s143, %s146
      %p152 = scmp.eq.s32.totalorder %s17, 0
      %p153 = por %p151, %p152
      %p154 = scmp.ne.s32.totalorder %s143, %s146
      %p155 = scmp.eq.s32.totalorder %s22, 3
      %p156 = por %p154, %p155
      %p157 = scmp.ne.s32.totalorder %s146, %s147
      %p158 = scmp.eq.s32.totalorder %s22, 0
      %p159 = por %p157, %p158
      %p160 = scmp.ne.s32.totalorder %s146, %s147
      %p161 = scmp.eq.s32.totalorder %s23, 3
      %p162 = por %p160, %p161
      %p164 = scmp.ne.s32.totalorder %s147, %s163
      %p165 = scmp.eq.s32.totalorder %s23, 0
      %p166 = por %p164, %p165
      %s167 = ssub.s32 %s25, %s32
      %p168 = scmp.eq.s32.totalorder %s167, 0
      %s170 = sadd.s32 %s169, 1
      %s171 = scalar_select %p168, %s169, %s170
      %p174 = pneg %p168
      %p175 = scmp.eq.s32.totalorder %s17, 3
      %p176 = por %p174, %p175
      %p177 = scmp.ne.s32.totalorder %s169, %s172
      %p178 = scmp.eq.s32.totalorder %s17, 0
      %p179 = por %p177, %p178
      %p180 = scmp.ne.s32.totalorder %s169, %s172
      %p181 = scmp.eq.s32.totalorder %s22, 3
      %p182 = por %p180, %p181
      %p183 = scmp.ne.s32.totalorder %s172, %s173
      %p184 = scmp.eq.s32.totalorder %s22, 0
      %p185 = por %p183, %p184
      %p186 = scmp.ne.s32.totalorder %s172, %s173
      %p187 = scmp.eq.s32.totalorder %s23, 3
      %p188 = por %p186, %p187
      %p190 = scmp.ne.s32.totalorder %s173, %s189
      %p191 = scmp.eq.s32.totalorder %s23, 0
      %p192 = por %p190, %p191
      %s193 = ssub.s32 %s25, %s32
      %p194 = scmp.eq.s32.totalorder %s193, 0
      %s196 = sadd.s32 %s195, 1
      %s197 = scalar_select %p194, %s195, %s196
      %p200 = pneg %p194
      %p201 = scmp.eq.s32.totalorder %s17, 3
      %p202 = por %p200, %p201
      %p203 = scmp.ne.s32.totalorder %s195, %s198
      %p204 = scmp.eq.s32.totalorder %s17, 0
      %p205 = por %p203, %p204
      %p206 = scmp.ne.s32.totalorder %s195, %s198
      %p207 = scmp.eq.s32.totalorder %s22, 3
      %p208 = por %p206, %p207
      %p209 = scmp.ne.s32.totalorder %s198, %s199
      %p210 = scmp.eq.s32.totalorder %s22, 0
      %p211 = por %p209, %p210
      %p212 = scmp.ne.s32.totalorder %s198, %s199
      %p213 = scmp.eq.s32.totalorder %s23, 3
      %p214 = por %p212, %p213
      %p216 = scmp.ne.s32.totalorder %s199, %s215
      %p217 = scmp.eq.s32.totalorder %s23, 0
      %p218 = por %p216, %p217
      %s220 = sadd.s32 %s219, 1
      %p223 = scmp.eq.s32.totalorder %s17, 3
      %p224 = scmp.ne.s32.totalorder %s219, %s221
      %p225 = scmp.eq.s32.totalorder %s17, 0
      %p226 = por %p224, %p225
      %p227 = scmp.ne.s32.totalorder %s219, %s221
      %p228 = scmp.eq.s32.totalorder %s22, 3
      %p229 = por %p227, %p228
      %p230 = scmp.ne.s32.totalorder %s221, %s222
      %p231 = scmp.eq.s32.totalorder %s22, 0
      %p232 = por %p230, %p231
      %p233 = scmp.ne.s32.totalorder %s221, %s222
      %p234 = scmp.eq.s32.totalorder %s23, 3
      %p235 = por %p233, %p234
      %p237 = scmp.ne.s32.totalorder %s222, %s236
      %p238 = scmp.eq.s32.totalorder %s23, 0
      %p239 = por %p237, %p238
      %s240 = ssub.s32 %s24, %s36
      %p241 = scmp.eq.s32.totalorder %s240, 0
      %s243 = sadd.s32 %s242, 1
      %s244 = scalar_select %p241, %s242, %s243
      %p247 = pneg %p241
      %p248 = scmp.eq.s32.totalorder %s17, 3
      %p249 = por %p247, %p248
      %p250 = scmp.ne.s32.totalorder %s242, %s245
      %p251 = scmp.eq.s32.totalorder %s17, 0
      %p252 = por %p250, %p251
      %p253 = scmp.ne.s32.totalorder %s242, %s245
      %p254 = scmp.eq.s32.totalorder %s22, 3
      %p255 = por %p253, %p254
      %p256 = scmp.ne.s32.totalorder %s245, %s246
      %p257 = scmp.eq.s32.totalorder %s22, 0
      %p258 = por %p256, %p257
      %p259 = scmp.ne.s32.totalorder %s245, %s246
      %p260 = scmp.eq.s32.totalorder %s23, 3
      %p261 = por %p259, %p260
      %p263 = scmp.ne.s32.totalorder %s246, %s262
      %p264 = scmp.eq.s32.totalorder %s23, 0
      %p265 = por %p263, %p264
      %p266 = scmp.le.s32.totalorder 1, %s17
      %p267 = scmp.lt.s32.totalorder %s17, 5
      %p268 = pnand %p266, %p267
      %p269 = pneg %p268
      // Predicated region
      $region9: #{transformer_embedder_forward.1} parent=5 // pred_check
        _
      $region10: #{transformer_embedder_forward.1} parent=5 // pred_check_branch
        %271 = sbr.rel (%p268) target = $region12
      $region11: #{transformer_embedder_forward.1} parent=5 // pred_region
        %s272 = ssub.s32 %s17, 1
        // Predicated region
        $region13: #{transformer_embedder_forward.1} parent=11 // pred_check
          %p273 = pneg %p232
        $region14: #{transformer_embedder_forward.1} parent=11 // pred_check_branch
          %275 = sbr.rel (%p273) target = $region16
        $region15: #{transformer_embedder_forward.1} parent=11 // pred_region
          _
        $region16: #{transformer_embedder_forward.1} parent=11 // pred_fallthru
          _
      $region12: #{transformer_embedder_forward.1} parent=5 // pred_fallthru
        _
      %p276 = scmp.lt.s32.totalorder %s17, 4
      // Predicated region
      $region17: #{transformer_embedder_forward.1} parent=5 // pred_check
        %p277 = pneg %p276
      $region18: #{transformer_embedder_forward.1} parent=5 // pred_check_branch
        %279 = sbr.rel (%p277) target = $region20
      $region19: #{transformer_embedder_forward.1} parent=5 // pred_region
        // Predicated region
        $region21: #{transformer_embedder_forward.1} parent=19 // pred_check
          %p280 = pneg %p49
        $region22: #{transformer_embedder_forward.1} parent=19 // pred_check_branch
          %282 = sbr.rel (%p280) target = $region24
        $region23: #{transformer_embedder_forward.1} parent=19 // pred_region
          %s283 = smul.u32 2, %s24
          %p284 = scmp.lt.s32.totalorder %s283, 3
          %s285 = scalar_select %p284, %s283, 3
          %s286 = smul.addr %s285, 8
          %s287 = scalar_lea.vmem %s0, %s286
          %s288 = smul.u32 2, %s24
        $region24: #{transformer_embedder_forward.1} parent=19 // pred_fallthru
          _
        // Predicated region
        $region25: #{transformer_embedder_forward.1} parent=19 // pred_check
          %p289 = pneg %p75
        $region26: #{transformer_embedder_forward.1} parent=19 // pred_check_branch
          %291 = sbr.rel (%p289) target = $region28
        $region27: #{transformer_embedder_forward.1} parent=19 // pred_region
          %p292 = scmp.lt.s32.totalorder %s25, 1
          %s293 = scalar_select %p292, %s25, 1
          %s294 = smul.addr %s293, 8
          %s295 = scalar_lea.vmem %s1, %s294
        $region28: #{transformer_embedder_forward.1} parent=19 // pred_fallthru
          _
        // Predicated region
        $region29: #{transformer_embedder_forward.1} parent=19 // pred_check
          %p296 = pneg %p101
        $region30: #{transformer_embedder_forward.1} parent=19 // pred_check_branch
          %298 = sbr.rel (%p296) target = $region32
        $region31: #{transformer_embedder_forward.1} parent=19 // pred_region
          %p299 = scmp.lt.s32.totalorder %s25, 1
          %s300 = scalar_select %p299, %s25, 1
          %s301 = smul.addr %s300, 4
          %s302 = smul.addr %s301, 4
          %s303 = scalar_lea.vmem %s2, %s302
        $region32: #{transformer_embedder_forward.1} parent=19 // pred_fallthru
          _
        // Predicated region
        $region33: #{transformer_embedder_forward.1} parent=19 // pred_check
          %p304 = pneg %p127
        $region34: #{transformer_embedder_forward.1} parent=19 // pred_check_branch
          %306 = sbr.rel (%p304) target = $region36
        $region35: #{transformer_embedder_forward.1} parent=19 // pred_region
          %p307 = scmp.lt.s32.totalorder %s25, 1
          %s308 = scalar_select %p307, %s25, 1
          %s309 = smul.addr %s308, 4
          %s310 = smul.addr %s309, 4
          %s311 = scalar_lea.vmem %s3, %s310
        $region36: #{transformer_embedder_forward.1} parent=19 // pred_fallthru
          _
        // Predicated region
        $region37: #{transformer_embedder_forward.1} parent=19 // pred_check
          %p312 = pneg %p153
        $region38: #{transformer_embedder_forward.1} parent=19 // pred_check_branch
          %314 = sbr.rel (%p312) target = $region40
        $region39: #{transformer_embedder_forward.1} parent=19 // pred_region
          %p315 = scmp.lt.s32.totalorder %s25, 1
          %s316 = scalar_select %p315, %s25, 1
          %s317 = smul.addr %s316, 4
          %s318 = smul.addr %s317, 4
          %s319 = scalar_lea.vmem %s4, %s318
        $region40: #{transformer_embedder_forward.1} parent=19 // pred_fallthru
          _
        // Predicated region
        $region41: #{transformer_embedder_forward.1} parent=19 // pred_check
          %p320 = pneg %p179
        $region42: #{transformer_embedder_forward.1} parent=19 // pred_check_branch
          %322 = sbr.rel (%p320) target = $region44
        $region43: #{transformer_embedder_forward.1} parent=19 // pred_region
          %p323 = scmp.lt.s32.totalorder %s25, 1
          %s324 = scalar_select %p323, %s25, 1
          %s325 = scalar_lea.vmem %s5, %s324
        $region44: #{transformer_embedder_forward.1} parent=19 // pred_fallthru
          _
        // Predicated region
        $region45: #{transformer_embedder_forward.1} parent=19 // pred_check
          %p326 = pneg %p205
        $region46: #{transformer_embedder_forward.1} parent=19 // pred_check_branch
          %328 = sbr.rel (%p326) target = $region48
        $region47: #{transformer_embedder_forward.1} parent=19 // pred_region
          %p329 = scmp.lt.s32.totalorder %s25, 1
          %s330 = scalar_select %p329, %s25, 1
          %s331 = smul.addr %s330, 16
          %s332 = smul.addr %s331, 4
          %s333 = scalar_lea.vmem %s6, %s332
        $region48: #{transformer_embedder_forward.1} parent=19 // pred_fallthru
          _
      $region20: #{transformer_embedder_forward.1} parent=5 // pred_fallthru
        _
      %p334 = scmp.le.s32.totalorder 1, %s17
      %p335 = scmp.lt.s32.totalorder %s17, 5
      %p336 = pnand %p334, %p335
      %p337 = pneg %p336
      // Predicated region
      $region49: #{transformer_embedder_forward.1} parent=5 // pred_check
        _
      $region50: #{transformer_embedder_forward.1} parent=5 // pred_check_branch
        %339 = sbr.rel (%p336) target = $region52
      $region51: #{transformer_embedder_forward.1} parent=5 // pred_region
        %s340 = ssub.s32 %s17, 1
        %s341 = smul.u32 2, %s26
        %p342 = scmp.lt.s32.totalorder %s341, 3
        %s343 = scalar_select %p342, %s341, 3
        %s344 = smul.addr %s343, 8
        %s345 = scalar_lea.vmem %s0, %s344
        %p346 = pneg %p55
        %p347 = pneg %p52
        %p348 = scmp.lt.s32.totalorder %s27, 1
        %s349 = scalar_select %p348, %s27, 1
        %s350 = smul.addr %s349, 8
        %s351 = scalar_lea.vmem %s1, %s350
        %p352 = pneg %p81
        %p353 = pneg %p78
        %p354 = scmp.lt.s32.totalorder %s27, 1
        %s355 = scalar_select %p354, %s27, 1
        %s356 = smul.addr %s355, 4
        %s357 = smul.addr %s356, 4
        %s358 = scalar_lea.vmem %s2, %s357
        %p359 = pneg %p107
        %p360 = pneg %p104
        %p361 = scmp.lt.s32.totalorder %s27, 1
        %s362 = scalar_select %p361, %s27, 1
        %s363 = smul.addr %s362, 4
        %s364 = smul.addr %s363, 4
        %s365 = scalar_lea.vmem %s3, %s364
        %p366 = pneg %p133
        %p367 = pneg %p130
        %p368 = scmp.lt.s32.totalorder %s27, 1
        %s369 = scalar_select %p368, %s27, 1
        %s370 = smul.addr %s369, 4
        %s371 = smul.addr %s370, 4
        %s372 = scalar_lea.vmem %s4, %s371
        %p373 = pneg %p159
        %p374 = pneg %p156
        %p375 = scmp.lt.s32.totalorder %s27, 1
        %s376 = scalar_select %p375, %s27, 1
        %s377 = scalar_lea.vmem %s5, %s376
        %p378 = pneg %p185
        %p379 = pneg %p182
        %p380 = scmp.lt.s32.totalorder %s27, 1
        %s381 = scalar_select %p380, %s27, 1
        %s382 = smul.addr %s381, 16
        %s383 = smul.addr %s382, 4
        %s384 = scalar_lea.vmem %s6, %s383
        %p385 = pneg %p211
        %p386 = pneg %p208
        %p387 = pneg %p232
        %p388 = pneg %p229
        %p389 = pneg %p258
        %p390 = pneg %p255
        %s391 = sand.u32 %s245, 1
        %s392 = scalar_lea.sflag [#allocation3], %s391
        %s393 = sand.u32 %s245, 1
        %s394 = smul.addr %s393, 16
        %s395 = scalar_lea.vmem [#allocation2], %s394
        %s396 = smul.u32 2, %s26
        %p397 = scmp.lt.s32.totalorder %s396, 3
        %s398 = scalar_select %p397, %s396, 3
        %s399 = smul.addr %s398, 8
        %s400 = scalar_lea.vmem %s0, %s399
        %s401 = smul.u32 2, %s26
        %p402 = scmp.lt.s32.totalorder %s27, 1
        %s403 = scalar_select %p402, %s27, 1
        %s404 = smul.addr %s403, 8
        %s405 = scalar_lea.vmem %s1, %s404
        %p406 = scmp.lt.s32.totalorder %s27, 1
        %s407 = scalar_select %p406, %s27, 1
        %s408 = smul.addr %s407, 4
        %s409 = smul.addr %s408, 4
        %s410 = scalar_lea.vmem %s2, %s409
        %p411 = scmp.lt.s32.totalorder %s27, 1
        %s412 = scalar_select %p411, %s27, 1
        %s413 = smul.addr %s412, 4
        %s414 = smul.addr %s413, 4
        %s415 = scalar_lea.vmem %s3, %s414
        %p416 = scmp.lt.s32.totalorder %s27, 1
        %s417 = scalar_select %p416, %s27, 1
        %s418 = smul.addr %s417, 4
        %s419 = smul.addr %s418, 4
        %s420 = scalar_lea.vmem %s4, %s419
        %p421 = scmp.lt.s32.totalorder %s27, 1
        %s422 = scalar_select %p421, %s27, 1
        %s423 = scalar_lea.vmem %s5, %s422
        %p424 = scmp.lt.s32.totalorder %s27, 1
        %s425 = scalar_select %p424, %s27, 1
        %s426 = smul.addr %s425, 16
        %s427 = smul.addr %s426, 4
        %s428 = scalar_lea.vmem %s6, %s427
        %s429 = smul.u32 2, %s26
        %p431 = scmp.eq.s32.totalorder %s27, 0
        // Predicated region
        $region53: #{transformer_embedder_forward.1} parent=51 // pred_check
          %p432 = pneg %p431
        $region54: #{transformer_embedder_forward.1} parent=51 // pred_check_branch
          %434 = sbr.rel (%p432) target = $region56
        $region55: #{transformer_embedder_forward.1} parent=51 // pred_region
          %v435 = vld [vmem:[%s400] sm:$0xff]
          %v436 = vld [vmem:[%s400 + $0x8] sm:$0xff]
          %vm437 = vcmask 261120
          %438 = vst.msk [vmem:[%s395] sm:$0xff] %vm437, %v435
          %439 = vst.msk [vmem:[%s395 + $0x8] sm:$0xff] %vm437, %v436
        $region56: #{transformer_embedder_forward.1} parent=51 // pred_fallthru
          _
        %v440 = vld [vmem:[%s395] sm:$0xff]
        %v441 = vld [vmem:[%s395 + $0x8] sm:$0xff]
        %v442 = vld [vmem:[%s405] sm:$0x3f]
        %vm443 = vcmask 261120
        %v444 = vsel %vm443, %v440, 0.0
        %445 = vadd.xlane.f32.xlu0 %v444
        %v446 = vpop.xlane.xlu0 %445
        %v447 = vsel %vm443, %v441, 0.0
        %448 = vadd.xlane.f32.xlu0 %v447
        %v449 = vpop.xlane.xlu0 %448
        %v450 = vrcp.pop 32.0
        %v451 = vmul.f32 32.0, %v450
        %v452 = vsub.f32 1.0, %v451
        %v453 = vmul.f32 %v450, %v452
        %v454 = vadd.f32 %v450, %v453
        %vm455 = vweird.f32 %v450
        %v456 = vsel %vm455, %v450, %v454
        %v457 = vmul.f32 %v446, %v456
        %v458 = vmul.f32 %v449, %v456
        %v459 = vsub.f32 %v440, %v457
        %v460 = vsub.f32 %v441, %v458
        %v461 = vmul.f32 %v459, %v459
        %v462 = vmul.f32 %v460, %v460
        %v463 = vsel %vm443, %v461, 0.0
        %464 = vadd.xlane.f32.xlu0 %v463
        %v465 = vpop.xlane.xlu0 %464
        %v466 = vsel %vm443, %v462, 0.0
        %467 = vadd.xlane.f32.xlu0 %v466
        %v468 = vpop.xlane.xlu0 %467
        %v469 = vmul.f32 %v465, %v456
        %v470 = vmul.f32 %v468, %v456
        %v471 = vadd.f32 %v469, 1e-05
        %v472 = vadd.f32 %v470, 1e-05
        %v473 = vrsqrt.pop %v471
        %v474 = vmul.f32 %v473, %v471
        %v475 = vmul.f32 %v474, %v473
        %v476 = vmul.f32 0.5, %v475
        %v477 = vsub.f32 1.5, %v476
        %v478 = vmul.f32 %v473, %v477
        %vm479 = vweird.f32 %v471
        %vm480 = vweird.f32 %v473
        %vm481 = vmor %vm479, %vm480
        %v482 = vsel %vm481, %v473, %v478
        %v483 = vrsqrt.pop %v472
        %v484 = vmul.f32 %v483, %v472
        %v485 = vmul.f32 %v484, %v483
        %v486 = vmul.f32 0.5, %v485
        %v487 = vsub.f32 1.5, %v486
        %v488 = vmul.f32 %v483, %v487
        %vm489 = vweird.f32 %v472
        %vm490 = vweird.f32 %v483
        %vm491 = vmor %vm489, %vm490
        %v492 = vsel %vm491, %v483, %v488
        %v493 = vmul.f32 %v459, %v482
        %v494 = vmul.f32 %v460, %v492
        %v495 = vperm.slane %v442, 0
        %v496 = vmul.f32 %v493, %v495
        %v497 = vmul.f32 %v494, %v495
        %v498 = vperm.slane %v442, 1
        %v499 = vadd.f32 %v496, %v498
        %v500 = vadd.f32 %v497, %v498
        %v501 = vpack.c.bf16 %v500, %v499
        %v502 = vld [vmem:[%s410] sm:$0xf]
        %v503 = vld [vmem:[%s410 + $0x4] sm:$0xf]
        %v504 = vld [vmem:[%s410 + $0x8] sm:$0xf]
        %v505 = vld [vmem:[%s410 + $0xc] sm:$0xf]
        %v510 = vunpack.c.l.b16 %v502
        %v511 = vunpack.c.l.b16 %v503
        %v512 = vunpack.c.l.b16 %v504
        %v513 = vunpack.c.l.b16 %v505
        %v514 = vpack.c.b16 %v511, %v510
        %v515 = vpack.c.b16 %v513, %v512
        %v519 = vsel %vm443, %v501, 0
        %521 = vmatpush.bf16.msra.mxu0 0
        %522 = vmatpush.bf16.msra.mxu0 0
        %523 = vmatpush.bf16.msra.mxu0 0
        %524 = vmatpush.bf16.msra.mxu0 0
        %525 = vmatpush.bf16.msra.mxu0 0
        %526 = vmatpush.bf16.msra.mxu0 0
        %527 = vmatpush.bf16.msra.mxu0 %v515
        %528 = vmatpush.bf16.msra.mxu0 %v514
        %529 = vmatmul.bf16.gmra.mxu0 %v519
        %v530 = vpop.f32.mrf.mxu0
        %v531 = vadd.f32 0.0, %v530
        %v532 = vpop.f32.mrf.mxu0
        %v533 = vadd.f32 0.0, %v532
        %534 = vdwg.mxu0
        %v535 = vpack.c.bf16 %v531, %v531
        %v536 = vpack.c.bf16 %v533, %v533
        %v538 = vunpack.c.l.b16 %v535
        %v539 = vpack.c.b16 %v538, %v538
        %540 = vrot.lane.b32.xlu0 %v539, 96
        %v541 = vpop.permute.xlu0 %540
        %vm542 = vcmask 64512
        %v544 = vsel %vm542, %v535, 0
        %v547 = vsel %vm542, %v541, 0
        %549 = vmatpush.bf16.xpose.msra.mxu0 0
        %550 = vmatpush.bf16.xpose.msra.mxu0 0
        %551 = vmatpush.bf16.xpose.msra.mxu0 0
        %552 = vmatpush.bf16.xpose.msra.mxu0 0
        %553 = vmatpush.bf16.xpose.msra.mxu0 0
        %554 = vmatpush.bf16.xpose.msra.mxu0 0
        %555 = vmatpush.bf16.xpose.msra.mxu0 0
        %556 = vmatpush.bf16.xpose.msra.mxu0 %v547
        %557 = vmatmul.bf16.gmra.mxu0 %v544
        %v558 = vpop.f32.mrf.mxu0
        %v559 = vadd.f32 0.0, %v558
        %v560 = vpop.f32.mrf.mxu0
        %561 = vdwg.mxu0
        %v563 = vunpack.c.l.b16 %v536
        %v564 = vpack.c.b16 %v563, %v563
        %565 = vrot.lane.b32.xlu0 %v564, 96
        %v566 = vpop.permute.xlu0 %565
        %v568 = vsel %vm542, %v536, 0
        %v571 = vsel %vm542, %v566, 0
        %573 = vmatpush.bf16.xpose.msra.mxu0 0
        %574 = vmatpush.bf16.xpose.msra.mxu0 0
        %575 = vmatpush.bf16.xpose.msra.mxu0 0
        %576 = vmatpush.bf16.xpose.msra.mxu0 0
        %577 = vmatpush.bf16.xpose.msra.mxu0 0
        %578 = vmatpush.bf16.xpose.msra.mxu0 0
        %579 = vmatpush.bf16.xpose.msra.mxu0 0
        %580 = vmatpush.bf16.xpose.msra.mxu0 %v571
        %581 = vmatmul.bf16.gmra.mxu0 %v568
        %v582 = vpop.f32.mrf.mxu0
        %v583 = vadd.f32 0.0, %v582
        %v584 = vpop.f32.mrf.mxu0
        %585 = vdwg.mxu0
        %v586 = vsel %vm542, %v559, -inf
        %587 = vmax.xlane.f32.xlu0 %v586
        %v588 = vpop.xlane.xlu0 %587
        %v589 = vsel %vm542, %v583, -inf
        %590 = vmax.xlane.f32.xlu0 %v589
        %v591 = vpop.xlane.xlu0 %590
        %v592 = vsub.f32 %v559, %v588
        %v593 = vsub.f32 %v583, %v591
        %v594 = vmul.f32 %v592, 1.442695
        %v595 = vpow.pop %v594
        %v596 = vmul.f32 %v593, 1.442695
        %v597 = vpow.pop %v596
        %v598 = vsel %vm542, %v595, 0.0
        %599 = vadd.xlane.f32.xlu0 %v598
        %v600 = vpop.xlane.xlu0 %599
        %v601 = vsel %vm542, %v597, 0.0
        %602 = vadd.xlane.f32.xlu0 %v601
        %v603 = vpop.xlane.xlu0 %602
        %v604 = vrcp.pop %v600
        %v605 = vmul.f32 %v600, %v604
        %v606 = vsub.f32 1.0, %v605
        %v607 = vmul.f32 %v604, %v606
        %v608 = vadd.f32 %v604, %v607
        %vm609 = vweird.f32 %v600
        %vm610 = vweird.f32 %v604
        %vm611 = vmor %vm609, %vm610
        %v612 = vsel %vm611, %v604, %v608
        %v613 = vand.u32 2147483647, %v600
        %vm614 = vcmp.eq.f32.partialorder %v613, 8.507059e+37
        %v615 = vand.u32 %v600, 2147483648
        %v616 = vor.u32 1.1754944e-38, %v615
        %v617 = vsel %vm614, %v616, %v612
        %v618 = vrcp.pop %v603
        %v619 = vmul.f32 %v603, %v618
        %v620 = vsub.f32 1.0, %v619
        %v621 = vmul.f32 %v618, %v620
        %v622 = vadd.f32 %v618, %v621
        %vm623 = vweird.f32 %v603
        %vm624 = vweird.f32 %v618
        %vm625 = vmor %vm623, %vm624
        %v626 = vsel %vm625, %v618, %v622
        %v627 = vand.u32 2147483647, %v603
        %vm628 = vcmp.eq.f32.partialorder %v627, 8.507059e+37
        %v629 = vand.u32 %v603, 2147483648
        %v630 = vor.u32 1.1754944e-38, %v629
        %v631 = vsel %vm628, %v630, %v626
        %v632 = vmul.f32 %v595, %v617
        %v633 = vmul.f32 %v597, %v631
        %v634 = vpack.c.bf16 %v632, %v632
        %v635 = vpack.c.bf16 %v633, %v633
        %636 = vrot.lane.b32.xlu0 %v539, 64
        %v637 = vpop.permute.xlu0 %636
        %v639 = vsel %vm542, %v634, 0
        %vm641 = vcmask 1043456
        %v643 = vsel %vm641, %v637, 0
        %645 = vmatpush.bf16.msra.mxu0 0
        %646 = vmatpush.bf16.msra.mxu0 0
        %647 = vmatpush.bf16.msra.mxu0 0
        %648 = vmatpush.bf16.msra.mxu0 0
        %649 = vmatpush.bf16.msra.mxu0 0
        %650 = vmatpush.bf16.msra.mxu0 0
        %651 = vmatpush.bf16.msra.mxu0 0
        %652 = vmatpush.bf16.msra.mxu0 %v643
        %653 = vmatmul.bf16.gmra.mxu0 %v639
        %v654 = vpop.f32.mrf.mxu0
        %v655 = vadd.f32 0.0, %v654
        %v656 = vpop.f32.mrf.mxu0
        %657 = vdwg.mxu0
        %658 = vrot.lane.b32.xlu0 %v564, 64
        %v659 = vpop.permute.xlu0 %658
        %v661 = vsel %vm542, %v635, 0
        %v664 = vsel %vm641, %v659, 0
        %666 = vmatpush.bf16.msra.mxu0 0
        %667 = vmatpush.bf16.msra.mxu0 0
        %668 = vmatpush.bf16.msra.mxu0 0
        %669 = vmatpush.bf16.msra.mxu0 0
        %670 = vmatpush.bf16.msra.mxu0 0
        %671 = vmatpush.bf16.msra.mxu0 0
        %672 = vmatpush.bf16.msra.mxu0 0
        %673 = vmatpush.bf16.msra.mxu0 %v664
        %674 = vmatmul.bf16.gmra.mxu0 %v661
        %v675 = vpop.f32.mrf.mxu0
        %v676 = vadd.f32 0.0, %v675
        %v677 = vpop.f32.mrf.mxu0
        %678 = vdwg.mxu0
        %679 = vrot.lane.b32.xlu0 %v539, 120
        %v680 = vpop.permute.xlu0 %679
        %681 = vrot.lane.b32.xlu0 %v539, 88
        %v682 = vpop.permute.xlu0 %681
        %v684 = vsel %vm542, %v680, 0
        %v687 = vsel %vm542, %v682, 0
        %689 = vmatpush.bf16.xpose.msra.mxu0 0
        %690 = vmatpush.bf16.xpose.msra.mxu0 0
        %691 = vmatpush.bf16.xpose.msra.mxu0 0
        %692 = vmatpush.bf16.xpose.msra.mxu0 0
        %693 = vmatpush.bf16.xpose.msra.mxu0 0
        %694 = vmatpush.bf16.xpose.msra.mxu0 0
        %695 = vmatpush.bf16.xpose.msra.mxu0 0
        %696 = vmatpush.bf16.xpose.msra.mxu0 %v687
        %697 = vmatmul.bf16.gmra.mxu0 %v684
        %v698 = vpop.f32.mrf.mxu0
        %v699 = vadd.f32 0.0, %v698
        %v700 = vpop.f32.mrf.mxu0
        %701 = vdwg.mxu0
        %702 = vrot.lane.b32.xlu0 %v564, 120
        %v703 = vpop.permute.xlu0 %702
        %704 = vrot.lane.b32.xlu0 %v564, 88
        %v705 = vpop.permute.xlu0 %704
        %v707 = vsel %vm542, %v703, 0
        %v710 = vsel %vm542, %v705, 0
        %712 = vmatpush.bf16.xpose.msra.mxu0 0
        %713 = vmatpush.bf16.xpose.msra.mxu0 0
        %714 = vmatpush.bf16.xpose.msra.mxu0 0
        %715 = vmatpush.bf16.xpose.msra.mxu0 0
        %716 = vmatpush.bf16.xpose.msra.mxu0 0
        %717 = vmatpush.bf16.xpose.msra.mxu0 0
        %718 = vmatpush.bf16.xpose.msra.mxu0 0
        %719 = vmatpush.bf16.xpose.msra.mxu0 %v710
        %720 = vmatmul.bf16.gmra.mxu0 %v707
        %v721 = vpop.f32.mrf.mxu0
        %v722 = vadd.f32 0.0, %v721
        %v723 = vpop.f32.mrf.mxu0
        %724 = vdwg.mxu0
        %v725 = vsel %vm542, %v699, -inf
        %726 = vmax.xlane.f32.xlu0 %v725
        %v727 = vpop.xlane.xlu0 %726
        %v728 = vsel %vm542, %v722, -inf
        %729 = vmax.xlane.f32.xlu0 %v728
        %v730 = vpop.xlane.xlu0 %729
        %v731 = vsub.f32 %v699, %v727
        %v732 = vsub.f32 %v722, %v730
        %v733 = vmul.f32 %v731, 1.442695
        %v734 = vpow.pop %v733
        %v735 = vmul.f32 %v732, 1.442695
        %v736 = vpow.pop %v735
        %v737 = vsel %vm542, %v734, 0.0
        %738 = vadd.xlane.f32.xlu0 %v737
        %v739 = vpop.xlane.xlu0 %738
        %v740 = vsel %vm542, %v736, 0.0
        %741 = vadd.xlane.f32.xlu0 %v740
        %v742 = vpop.xlane.xlu0 %741
        %v743 = vrcp.pop %v739
        %v744 = vmul.f32 %v739, %v743
        %v745 = vsub.f32 1.0, %v744
        %v746 = vmul.f32 %v743, %v745
        %v747 = vadd.f32 %v743, %v746
        %vm748 = vweird.f32 %v739
        %vm749 = vweird.f32 %v743
        %vm750 = vmor %vm748, %vm749
        %v751 = vsel %vm750, %v743, %v747
        %v752 = vand.u32 2147483647, %v739
        %vm753 = vcmp.eq.f32.partialorder %v752, 8.507059e+37
        %v754 = vand.u32 %v739, 2147483648
        %v755 = vor.u32 1.1754944e-38, %v754
        %v756 = vsel %vm753, %v755, %v751
        %v757 = vrcp.pop %v742
        %v758 = vmul.f32 %v742, %v757
        %v759 = vsub.f32 1.0, %v758
        %v760 = vmul.f32 %v757, %v759
        %v761 = vadd.f32 %v757, %v760
        %vm762 = vweird.f32 %v742
        %vm763 = vweird.f32 %v757
        %vm764 = vmor %vm762, %vm763
        %v765 = vsel %vm764, %v757, %v761
        %v766 = vand.u32 2147483647, %v742
        %vm767 = vcmp.eq.f32.partialorder %v766, 8.507059e+37
        %v768 = vand.u32 %v742, 2147483648
        %v769 = vor.u32 1.1754944e-38, %v768
        %v770 = vsel %vm767, %v769, %v765
        %v771 = vmul.f32 %v734, %v756
        %v772 = vmul.f32 %v736, %v770
        %v773 = vpack.c.bf16 %v771, %v771
        %v774 = vpack.c.bf16 %v772, %v772
        %775 = vrot.lane.b32.xlu0 %v539, 56
        %v776 = vpop.permute.xlu0 %775
        %v778 = vsel %vm542, %v773, 0
        %v781 = vsel %vm641, %v776, 0
        %783 = vmatpush.bf16.msra.mxu0 0
        %784 = vmatpush.bf16.msra.mxu0 0
        %785 = vmatpush.bf16.msra.mxu0 0
        %786 = vmatpush.bf16.msra.mxu0 0
        %787 = vmatpush.bf16.msra.mxu0 0
        %788 = vmatpush.bf16.msra.mxu0 0
        %789 = vmatpush.bf16.msra.mxu0 0
        %790 = vmatpush.bf16.msra.mxu0 %v781
        %791 = vmatmul.bf16.gmra.mxu0 %v778
        %v792 = vpop.f32.mrf.mxu0
        %v793 = vadd.f32 0.0, %v792
        %v794 = vpop.f32.mrf.mxu0
        %795 = vdwg.mxu0
        %796 = vrot.lane.b32.xlu0 %v564, 56
        %v797 = vpop.permute.xlu0 %796
        %v799 = vsel %vm542, %v774, 0
        %v802 = vsel %vm641, %v797, 0
        %804 = vmatpush.bf16.msra.mxu0 0
        %805 = vmatpush.bf16.msra.mxu0 0
        %806 = vmatpush.bf16.msra.mxu0 0
        %807 = vmatpush.bf16.msra.mxu0 0
        %808 = vmatpush.bf16.msra.mxu0 0
        %809 = vmatpush.bf16.msra.mxu0 0
        %810 = vmatpush.bf16.msra.mxu0 0
        %811 = vmatpush.bf16.msra.mxu0 %v802
        %812 = vmatmul.bf16.gmra.mxu0 %v799
        %v813 = vpop.f32.mrf.mxu0
        %v814 = vadd.f32 0.0, %v813
        %v815 = vpop.f32.mrf.mxu0
        %816 = vdwg.mxu0
        %817 = vrot.lane.b32.xlu0 %v539, 112
        %v818 = vpop.permute.xlu0 %817
        %819 = vrot.lane.b32.xlu0 %v539, 80
        %v820 = vpop.permute.xlu0 %819
        %v822 = vsel %vm542, %v818, 0
        %v825 = vsel %vm542, %v820, 0
        %827 = vmatpush.bf16.xpose.msra.mxu0 0
        %828 = vmatpush.bf16.xpose.msra.mxu0 0
        %829 = vmatpush.bf16.xpose.msra.mxu0 0
        %830 = vmatpush.bf16.xpose.msra.mxu0 0
        %831 = vmatpush.bf16.xpose.msra.mxu0 0
        %832 = vmatpush.bf16.xpose.msra.mxu0 0
        %833 = vmatpush.bf16.xpose.msra.mxu0 0
        %834 = vmatpush.bf16.xpose.msra.mxu0 %v825
        %835 = vmatmul.bf16.gmra.mxu0 %v822
        %v836 = vpop.f32.mrf.mxu0
        %v837 = vadd.f32 0.0, %v836
        %v838 = vpop.f32.mrf.mxu0
        %839 = vdwg.mxu0
        %840 = vrot.lane.b32.xlu0 %v564, 112
        %v841 = vpop.permute.xlu0 %840
        %842 = vrot.lane.b32.xlu0 %v564, 80
        %v843 = vpop.permute.xlu0 %842
        %v845 = vsel %vm542, %v841, 0
        %v848 = vsel %vm542, %v843, 0
        %850 = vmatpush.bf16.xpose.msra.mxu0 0
        %851 = vmatpush.bf16.xpose.msra.mxu0 0
        %852 = vmatpush.bf16.xpose.msra.mxu0 0
        %853 = vmatpush.bf16.xpose.msra.mxu0 0
        %854 = vmatpush.bf16.xpose.msra.mxu0 0
        %855 = vmatpush.bf16.xpose.msra.mxu0 0
        %856 = vmatpush.bf16.xpose.msra.mxu0 0
        %857 = vmatpush.bf16.xpose.msra.mxu0 %v848
        %858 = vmatmul.bf16.gmra.mxu0 %v845
        %v859 = vpop.f32.mrf.mxu0
        %v860 = vadd.f32 0.0, %v859
        %v861 = vpop.f32.mrf.mxu0
        %862 = vdwg.mxu0
        %v863 = vsel %vm542, %v837, -inf
        %864 = vmax.xlane.f32.xlu0 %v863
        %v865 = vpop.xlane.xlu0 %864
        %v866 = vsel %vm542, %v860, -inf
        %867 = vmax.xlane.f32.xlu0 %v866
        %v868 = vpop.xlane.xlu0 %867
        %v869 = vsub.f32 %v837, %v865
        %v870 = vsub.f32 %v860, %v868
        %v871 = vmul.f32 %v869, 1.442695
        %v872 = vpow.pop %v871
        %v873 = vmul.f32 %v870, 1.442695
        %v874 = vpow.pop %v873
        %v875 = vsel %vm542, %v872, 0.0
        %876 = vadd.xlane.f32.xlu0 %v875
        %v877 = vpop.xlane.xlu0 %876
        %v878 = vsel %vm542, %v874, 0.0
        %879 = vadd.xlane.f32.xlu0 %v878
        %v880 = vpop.xlane.xlu0 %879
        %v881 = vrcp.pop %v877
        %v882 = vmul.f32 %v877, %v881
        %v883 = vsub.f32 1.0, %v882
        %v884 = vmul.f32 %v881, %v883
        %v885 = vadd.f32 %v881, %v884
        %vm886 = vweird.f32 %v877
        %vm887 = vweird.f32 %v881
        %vm888 = vmor %vm886, %vm887
        %v889 = vsel %vm888, %v881, %v885
        %v890 = vand.u32 2147483647, %v877
        %vm891 = vcmp.eq.f32.partialorder %v890, 8.507059e+37
        %v892 = vand.u32 %v877, 2147483648
        %v893 = vor.u32 1.1754944e-38, %v892
        %v894 = vsel %vm891, %v893, %v889
        %v895 = vrcp.pop %v880
        %v896 = vmul.f32 %v880, %v895
        %v897 = vsub.f32 1.0, %v896
        %v898 = vmul.f32 %v895, %v897
        %v899 = vadd.f32 %v895, %v898
        %vm900 = vweird.f32 %v880
        %vm901 = vweird.f32 %v895
        %vm902 = vmor %vm900, %vm901
        %v903 = vsel %vm902, %v895, %v899
        %v904 = vand.u32 2147483647, %v880
        %vm905 = vcmp.eq.f32.partialorder %v904, 8.507059e+37
        %v906 = vand.u32 %v880, 2147483648
        %v907 = vor.u32 1.1754944e-38, %v906
        %v908 = vsel %vm905, %v907, %v903
        %v909 = vmul.f32 %v872, %v894
        %v910 = vmul.f32 %v874, %v908
        %v911 = vpack.c.bf16 %v909, %v909
        %v912 = vpack.c.bf16 %v910, %v910
        %913 = vrot.lane.b32.xlu0 %v539, 48
        %v914 = vpop.permute.xlu0 %913
        %v916 = vsel %vm542, %v911, 0
        %v919 = vsel %vm641, %v914, 0
        %921 = vmatpush.bf16.msra.mxu0 0
        %922 = vmatpush.bf16.msra.mxu0 0
        %923 = vmatpush.bf16.msra.mxu0 0
        %924 = vmatpush.bf16.msra.mxu0 0
        %925 = vmatpush.bf16.msra.mxu0 0
        %926 = vmatpush.bf16.msra.mxu0 0
        %927 = vmatpush.bf16.msra.mxu0 0
        %928 = vmatpush.bf16.msra.mxu0 %v919
        %929 = vmatmul.bf16.gmra.mxu0 %v916
        %v930 = vpop.f32.mrf.mxu0
        %v931 = vadd.f32 0.0, %v930
        %v932 = vpop.f32.mrf.mxu0
        %933 = vdwg.mxu0
        %934 = vrot.lane.b32.xlu0 %v564, 48
        %v935 = vpop.permute.xlu0 %934
        %v937 = vsel %vm542, %v912, 0
        %v940 = vsel %vm641, %v935, 0
        %942 = vmatpush.bf16.msra.mxu0 0
        %943 = vmatpush.bf16.msra.mxu0 0
        %944 = vmatpush.bf16.msra.mxu0 0
        %945 = vmatpush.bf16.msra.mxu0 0
        %946 = vmatpush.bf16.msra.mxu0 0
        %947 = vmatpush.bf16.msra.mxu0 0
        %948 = vmatpush.bf16.msra.mxu0 0
        %949 = vmatpush.bf16.msra.mxu0 %v940
        %950 = vmatmul.bf16.gmra.mxu0 %v937
        %v951 = vpop.f32.mrf.mxu0
        %v952 = vadd.f32 0.0, %v951
        %v953 = vpop.f32.mrf.mxu0
        %954 = vdwg.mxu0
        %955 = vrot.lane.b32.xlu0 %v539, 104
        %v956 = vpop.permute.xlu0 %955
        %957 = vrot.lane.b32.xlu0 %v539, 72
        %v958 = vpop.permute.xlu0 %957
        %v960 = vsel %vm542, %v956, 0
        %v963 = vsel %vm542, %v958, 0
        %965 = vmatpush.bf16.xpose.msra.mxu0 0
        %966 = vmatpush.bf16.xpose.msra.mxu0 0
        %967 = vmatpush.bf16.xpose.msra.mxu0 0
        %968 = vmatpush.bf16.xpose.msra.mxu0 0
        %969 = vmatpush.bf16.xpose.msra.mxu0 0
        %970 = vmatpush.bf16.xpose.msra.mxu0 0
        %971 = vmatpush.bf16.xpose.msra.mxu0 0
        %972 = vmatpush.bf16.xpose.msra.mxu0 %v963
        %973 = vmatmul.bf16.gmra.mxu0 %v960
        %v974 = vpop.f32.mrf.mxu0
        %v975 = vadd.f32 0.0, %v974
        %v976 = vpop.f32.mrf.mxu0
        %977 = vdwg.mxu0
        %978 = vrot.lane.b32.xlu0 %v564, 104
        %v979 = vpop.permute.xlu0 %978
        %980 = vrot.lane.b32.xlu0 %v564, 72
        %v981 = vpop.permute.xlu0 %980
        %v983 = vsel %vm542, %v979, 0
        %v986 = vsel %vm542, %v981, 0
        %988 = vmatpush.bf16.xpose.msra.mxu0 0
        %989 = vmatpush.bf16.xpose.msra.mxu0 0
        %990 = vmatpush.bf16.xpose.msra.mxu0 0
        %991 = vmatpush.bf16.xpose.msra.mxu0 0
        %992 = vmatpush.bf16.xpose.msra.mxu0 0
        %993 = vmatpush.bf16.xpose.msra.mxu0 0
        %994 = vmatpush.bf16.xpose.msra.mxu0 0
        %995 = vmatpush.bf16.xpose.msra.mxu0 %v986
        %996 = vmatmul.bf16.gmra.mxu0 %v983
        %v997 = vpop.f32.mrf.mxu0
        %v998 = vadd.f32 0.0, %v997
        %v999 = vpop.f32.mrf.mxu0
        %1000 = vdwg.mxu0
        %v1001 = vsel %vm542, %v975, -inf
        %1002 = vmax.xlane.f32.xlu0 %v1001
        %v1003 = vpop.xlane.xlu0 %1002
        %v1004 = vsel %vm542, %v998, -inf
        %1005 = vmax.xlane.f32.xlu0 %v1004
        %v1006 = vpop.xlane.xlu0 %1005
        %v1007 = vsub.f32 %v975, %v1003
        %v1008 = vsub.f32 %v998, %v1006
        %v1009 = vmul.f32 %v1007, 1.442695
        %v1010 = vpow.pop %v1009
        %v1011 = vmul.f32 %v1008, 1.442695
        %v1012 = vpow.pop %v1011
        %v1013 = vsel %vm542, %v1010, 0.0
        %1014 = vadd.xlane.f32.xlu0 %v1013
        %v1015 = vpop.xlane.xlu0 %1014
        %v1016 = vsel %vm542, %v1012, 0.0
        %1017 = vadd.xlane.f32.xlu0 %v1016
        %v1018 = vpop.xlane.xlu0 %1017
        %v1019 = vrcp.pop %v1015
        %v1020 = vmul.f32 %v1015, %v1019
        %v1021 = vsub.f32 1.0, %v1020
        %v1022 = vmul.f32 %v1019, %v1021
        %v1023 = vadd.f32 %v1019, %v1022
        %vm1024 = vweird.f32 %v1015
        %vm1025 = vweird.f32 %v1019
        %vm1026 = vmor %vm1024, %vm1025
        %v1027 = vsel %vm1026, %v1019, %v1023
        %v1028 = vand.u32 2147483647, %v1015
        %vm1029 = vcmp.eq.f32.partialorder %v1028, 8.507059e+37
        %v1030 = vand.u32 %v1015, 2147483648
        %v1031 = vor.u32 1.1754944e-38, %v1030
        %v1032 = vsel %vm1029, %v1031, %v1027
        %v1033 = vrcp.pop %v1018
        %v1034 = vmul.f32 %v1018, %v1033
        %v1035 = vsub.f32 1.0, %v1034
        %v1036 = vmul.f32 %v1033, %v1035
        %v1037 = vadd.f32 %v1033, %v1036
        %vm1038 = vweird.f32 %v1018
        %vm1039 = vweird.f32 %v1033
        %vm1040 = vmor %vm1038, %vm1039
        %v1041 = vsel %vm1040, %v1033, %v1037
        %v1042 = vand.u32 2147483647, %v1018
        %vm1043 = vcmp.eq.f32.partialorder %v1042, 8.507059e+37
        %v1044 = vand.u32 %v1018, 2147483648
        %v1045 = vor.u32 1.1754944e-38, %v1044
        %v1046 = vsel %vm1043, %v1045, %v1041
        %v1047 = vmul.f32 %v1010, %v1032
        %v1048 = vmul.f32 %v1012, %v1046
        %v1049 = vpack.c.bf16 %v1047, %v1047
        %v1050 = vpack.c.bf16 %v1048, %v1048
        %1051 = vrot.lane.b32.xlu0 %v539, 40
        %v1052 = vpop.permute.xlu0 %1051
        %v1054 = vsel %vm542, %v1049, 0
        %v1057 = vsel %vm641, %v1052, 0
        %1059 = vmatpush.bf16.msra.mxu0 0
        %1060 = vmatpush.bf16.msra.mxu0 0
        %1061 = vmatpush.bf16.msra.mxu0 0
        %1062 = vmatpush.bf16.msra.mxu0 0
        %1063 = vmatpush.bf16.msra.mxu0 0
        %1064 = vmatpush.bf16.msra.mxu0 0
        %1065 = vmatpush.bf16.msra.mxu0 0
        %1066 = vmatpush.bf16.msra.mxu0 %v1057
        %1067 = vmatmul.bf16.gmra.mxu0 %v1054
        %v1068 = vpop.f32.mrf.mxu0
        %v1069 = vadd.f32 0.0, %v1068
        %v1070 = vpop.f32.mrf.mxu0
        %1071 = vdwg.mxu0
        %1072 = vrot.lane.b32.xlu0 %v564, 40
        %v1073 = vpop.permute.xlu0 %1072
        %v1075 = vsel %vm542, %v1050, 0
        %v1078 = vsel %vm641, %v1073, 0
        %1080 = vmatpush.bf16.msra.mxu0 0
        %1081 = vmatpush.bf16.msra.mxu0 0
        %1082 = vmatpush.bf16.msra.mxu0 0
        %1083 = vmatpush.bf16.msra.mxu0 0
        %1084 = vmatpush.bf16.msra.mxu0 0
        %1085 = vmatpush.bf16.msra.mxu0 0
        %1086 = vmatpush.bf16.msra.mxu0 0
        %1087 = vmatpush.bf16.msra.mxu0 %v1078
        %1088 = vmatmul.bf16.gmra.mxu0 %v1075
        %v1089 = vpop.f32.mrf.mxu0
        %v1090 = vadd.f32 0.0, %v1089
        %v1091 = vpop.f32.mrf.mxu0
        %1092 = vdwg.mxu0
        %1095 = vrot.lane.b32.xlu0 %v793, 8
        %v1096 = vpop.permute.xlu0 %1095
        %1097 = vrot.lane.b32.xlu0 %v814, 8
        %v1098 = vpop.permute.xlu0 %1097
        %1103 = vrot.lane.b32.xlu0 %v931, 16
        %v1104 = vpop.permute.xlu0 %1103
        %1105 = vrot.lane.b32.xlu0 %v952, 16
        %v1106 = vpop.permute.xlu0 %1105
        %1111 = vrot.lane.b32.xlu0 %v1069, 24
        %v1112 = vpop.permute.xlu0 %1111
        %1113 = vrot.lane.b32.xlu0 %v1090, 24
        %v1114 = vpop.permute.xlu0 %1113
        %v1117 = vsel %vm542, %v655, %v1096
        %v1118 = vsel %vm542, %v676, %v1098
        %vm1119 = vcmask 130048
        %v1120 = vsel %vm1119, %v1117, %v1104
        %v1121 = vsel %vm1119, %v1118, %v1106
        %vm1122 = vcmask 195584
        %v1123 = vsel %vm1122, %v1120, %v1112
        %v1124 = vsel %vm1122, %v1121, %v1114
        %v1125 = vpack.c.bf16 %v1124, %v1123
        %v1126 = vld [vmem:[%s415] sm:$0xf]
        %v1127 = vld [vmem:[%s415 + $0x4] sm:$0xf]
        %v1128 = vld [vmem:[%s415 + $0x8] sm:$0xf]
        %v1129 = vld [vmem:[%s415 + $0xc] sm:$0xf]
        %v1130 = vperm.slane %v442, 4
        %v1135 = vunpack.c.l.b16 %v1126
        %v1136 = vunpack.c.l.b16 %v1127
        %v1137 = vunpack.c.l.b16 %v1128
        %v1138 = vunpack.c.l.b16 %v1129
        %v1139 = vpack.c.b16 %v1136, %v1135
        %v1140 = vpack.c.b16 %v1138, %v1137
        %v1144 = vsel %vm443, %v1125, 0
        %1146 = vmatpush.bf16.msra.mxu0 0
        %1147 = vmatpush.bf16.msra.mxu0 0
        %1148 = vmatpush.bf16.msra.mxu0 0
        %1149 = vmatpush.bf16.msra.mxu0 0
        %1150 = vmatpush.bf16.msra.mxu0 0
        %1151 = vmatpush.bf16.msra.mxu0 0
        %1152 = vmatpush.bf16.msra.mxu0 %v1140
        %1153 = vmatpush.bf16.msra.mxu0 %v1139
        %1154 = vmatmul.bf16.gmra.mxu0 %v1144
        %v1155 = vpop.f32.mrf.mxu0
        %v1156 = vadd.f32 %v1130, %v1155
        %v1157 = vpop.f32.mrf.mxu0
        %v1158 = vadd.f32 %v1130, %v1157
        %1159 = vdwg.mxu0
        %v1160 = vadd.f32 %v440, %v1156
        %v1161 = vadd.f32 %v441, %v1158
        %v1162 = vsel %vm443, %v1160, 0.0
        %1163 = vadd.xlane.f32.xlu0 %v1162
        %v1164 = vpop.xlane.xlu0 %1163
        %v1165 = vsel %vm443, %v1161, 0.0
        %1166 = vadd.xlane.f32.xlu0 %v1165
        %v1167 = vpop.xlane.xlu0 %1166
        %v1168 = vmul.f32 %v1164, %v456
        %v1169 = vmul.f32 %v1167, %v456
        %v1170 = vsub.f32 %v1160, %v1168
        %v1171 = vsub.f32 %v1161, %v1169
        %v1172 = vmul.f32 %v1170, %v1170
        %v1173 = vmul.f32 %v1171, %v1171
        %v1174 = vsel %vm443, %v1172, 0.0
        %1175 = vadd.xlane.f32.xlu0 %v1174
        %v1176 = vpop.xlane.xlu0 %1175
        %v1177 = vsel %vm443, %v1173, 0.0
        %1178 = vadd.xlane.f32.xlu0 %v1177
        %v1179 = vpop.xlane.xlu0 %1178
        %v1180 = vmul.f32 %v1176, %v456
        %v1181 = vmul.f32 %v1179, %v456
        %v1182 = vadd.f32 %v1180, 1e-05
        %v1183 = vadd.f32 %v1181, 1e-05
        %v1184 = vrsqrt.pop %v1182
        %v1185 = vmul.f32 %v1184, %v1182
        %v1186 = vmul.f32 %v1185, %v1184
        %v1187 = vmul.f32 0.5, %v1186
        %v1188 = vsub.f32 1.5, %v1187
        %v1189 = vmul.f32 %v1184, %v1188
        %vm1190 = vweird.f32 %v1182
        %vm1191 = vweird.f32 %v1184
        %vm1192 = vmor %vm1190, %vm1191
        %v1193 = vsel %vm1192, %v1184, %v1189
        %v1194 = vrsqrt.pop %v1183
        %v1195 = vmul.f32 %v1194, %v1183
        %v1196 = vmul.f32 %v1195, %v1194
        %v1197 = vmul.f32 0.5, %v1196
        %v1198 = vsub.f32 1.5, %v1197
        %v1199 = vmul.f32 %v1194, %v1198
        %vm1200 = vweird.f32 %v1183
        %vm1201 = vweird.f32 %v1194
        %vm1202 = vmor %vm1200, %vm1201
        %v1203 = vsel %vm1202, %v1194, %v1199
        %v1204 = vmul.f32 %v1170, %v1193
        %v1205 = vmul.f32 %v1171, %v1203
        %v1206 = vperm.slane %v442, 2
        %v1207 = vmul.f32 %v1204, %v1206
        %v1208 = vmul.f32 %v1205, %v1206
        %v1209 = vperm.slane %v442, 3
        %v1210 = vadd.f32 %v1207, %v1209
        %v1211 = vadd.f32 %v1208, %v1209
        %v1212 = vpack.c.bf16 %v1211, %v1210
        %v1213 = vld [vmem:[%s420] sm:$0xf]
        %v1214 = vld [vmem:[%s420 + $0x4] sm:$0xf]
        %v1215 = vld [vmem:[%s420 + $0x8] sm:$0xf]
        %v1216 = vld [vmem:[%s420 + $0xc] sm:$0xf]
        %v1217 = vld [vmem:[%s423] sm:$0x1]
        %v1219 = vperm.slane %v1217, 0
        %v1225 = vunpack.c.l.b16 %v1213
        %v1226 = vunpack.c.l.b16 %v1214
        %v1227 = vunpack.c.l.b16 %v1215
        %v1228 = vunpack.c.l.b16 %v1216
        %v1229 = vpack.c.b16 %v1226, %v1225
        %v1230 = vpack.c.b16 %v1228, %v1227
        %v1234 = vsel %vm443, %v1212, 0
        %1236 = vmatpush.bf16.msra.mxu0 0
        %1237 = vmatpush.bf16.msra.mxu0 0
        %1238 = vmatpush.bf16.msra.mxu0 0
        %1239 = vmatpush.bf16.msra.mxu0 0
        %1240 = vmatpush.bf16.msra.mxu0 0
        %1241 = vmatpush.bf16.msra.mxu0 0
        %1242 = vmatpush.bf16.msra.mxu0 %v1230
        %1243 = vmatpush.bf16.msra.mxu0 %v1229
        %1244 = vmatmul.bf16.gmra.mxu0 %v1234
        %v1245 = vpop.f32.mrf.mxu0
        %v1246 = vadd.f32 %v1219, %v1245
        %v1247 = vpop.f32.mrf.mxu0
        %v1248 = vadd.f32 %v1219, %v1247
        %1249 = vdwg.mxu0
        %v1250 = vmul.f32 %v1246, 0.5
        %v1251 = vmul.f32 %v1248, 0.5
        %v1252 = vmul.f32 %v1246, 0.70710677
        %v1253 = vmul.f32 %v1248, 0.70710677
        %v1254 = vmul.f32 %v1252, %v1252
        %v1255 = vmin.f32 16.0, %v1254
        %v1256 = vmul.f32 %v1255, 2.1237322e-06
        %v1257 = vadd.f32 %v1256, 0.00028619796
        %v1258 = vmul.f32 %v1255, %v1257
        %v1259 = vadd.f32 %v1258, 0.0036580483
        %v1260 = vmul.f32 %v1255, %v1259
        %v1261 = vadd.f32 %v1260, 0.05243302
        %v1262 = vmul.f32 %v1255, %v1261
        %v1263 = vadd.f32 %v1262, 0.18741608
        %v1264 = vmul.f32 %v1255, %v1263
        %v1265 = vadd.f32 %v1264, 1.1283791
        %v1266 = vmul.f32 %v1252, %v1265
        %v1267 = vmul.f32 %v1255, 3.8918573e-05
        %v1268 = vadd.f32 %v1267, 0.001143296
        %v1269 = vmul.f32 %v1255, %v1268
        %v1270 = vadd.f32 %v1269, 0.014752088
        %v1271 = vmul.f32 %v1255, %v1270
        %v1272 = vadd.f32 %v1271, 0.112945676
        %v1273 = vmul.f32 %v1255, %v1272
        %v1274 = vadd.f32 %v1273, 0.4994258
        %v1275 = vmul.f32 %v1255, %v1274
        %v1276 = vadd.f32 %v1275, 1.0
        %v1277 = vrcp.pop %v1276
        %v1278 = vmul.f32 %v1276, %v1277
        %v1279 = vsub.f32 1.0, %v1278
        %v1280 = vmul.f32 %v1277, %v1279
        %v1281 = vadd.f32 %v1277, %v1280
        %vm1282 = vweird.f32 %v1276
        %vm1283 = vweird.f32 %v1277
        %vm1284 = vmor %vm1282, %vm1283
        %v1285 = vsel %vm1284, %v1277, %v1281
        %v1286 = vand.u32 2147483647, %v1276
        %vm1287 = vcmp.eq.f32.partialorder %v1286, 8.507059e+37
        %v1288 = vand.u32 %v1276, 2147483648
        %v1289 = vor.u32 1.1754944e-38, %v1288
        %v1290 = vsel %vm1287, %v1289, %v1285
        %v1291 = vmul.f32 %v1266, %v1290
        %v1292 = vmin.f32 %v1291, 1.0
        %v1293 = vmax.f32 %v1292, -1.0
        %v1294 = vmul.f32 %v1253, %v1253
        %v1295 = vmin.f32 16.0, %v1294
        %v1296 = vmul.f32 %v1295, 2.1237322e-06
        %v1297 = vadd.f32 %v1296, 0.00028619796
        %v1298 = vmul.f32 %v1295, %v1297
        %v1299 = vadd.f32 %v1298, 0.0036580483
        %v1300 = vmul.f32 %v1295, %v1299
        %v1301 = vadd.f32 %v1300, 0.05243302
        %v1302 = vmul.f32 %v1295, %v1301
        %v1303 = vadd.f32 %v1302, 0.18741608
        %v1304 = vmul.f32 %v1295, %v1303
        %v1305 = vadd.f32 %v1304, 1.1283791
        %v1306 = vmul.f32 %v1253, %v1305
        %v1307 = vmul.f32 %v1295, 3.8918573e-05
        %v1308 = vadd.f32 %v1307, 0.001143296
        %v1309 = vmul.f32 %v1295, %v1308
        %v1310 = vadd.f32 %v1309, 0.014752088
        %v1311 = vmul.f32 %v1295, %v1310
        %v1312 = vadd.f32 %v1311, 0.112945676
        %v1313 = vmul.f32 %v1295, %v1312
        %v1314 = vadd.f32 %v1313, 0.4994258
        %v1315 = vmul.f32 %v1295, %v1314
        %v1316 = vadd.f32 %v1315, 1.0
        %v1317 = vrcp.pop %v1316
        %v1318 = vmul.f32 %v1316, %v1317
        %v1319 = vsub.f32 1.0, %v1318
        %v1320 = vmul.f32 %v1317, %v1319
        %v1321 = vadd.f32 %v1317, %v1320
        %vm1322 = vweird.f32 %v1316
        %vm1323 = vweird.f32 %v1317
        %vm1324 = vmor %vm1322, %vm1323
        %v1325 = vsel %vm1324, %v1317, %v1321
        %v1326 = vand.u32 2147483647, %v1316
        %vm1327 = vcmp.eq.f32.partialorder %v1326, 8.507059e+37
        %v1328 = vand.u32 %v1316, 2147483648
        %v1329 = vor.u32 1.1754944e-38, %v1328
        %v1330 = vsel %vm1327, %v1329, %v1325
        %v1331 = vmul.f32 %v1306, %v1330
        %v1332 = vmin.f32 %v1331, 1.0
        %v1333 = vmax.f32 %v1332, -1.0
        %v1334 = vadd.f32 %v1293, 1.0
        %v1335 = vadd.f32 %v1333, 1.0
        %v1336 = vmul.f32 %v1250, %v1334
        %v1337 = vmul.f32 %v1251, %v1335
        %v1338 = vpack.c.bf16 %v1337, %v1336
        %v1339 = vld [vmem:[%s428] sm:$0xf]
        %v1340 = vld [vmem:[%s428 + $0x4] sm:$0xf]
        %v1341 = vld [vmem:[%s428 + $0x8] sm:$0xf]
        %v1342 = vld [vmem:[%s428 + $0xc] sm:$0xf]
        %v1343 = vld [vmem:[%s428 + $0x10] sm:$0xf]
        %v1344 = vld [vmem:[%s428 + $0x14] sm:$0xf]
        %v1345 = vld [vmem:[%s428 + $0x18] sm:$0xf]
        %v1346 = vld [vmem:[%s428 + $0x1c] sm:$0xf]
        %v1347 = vld [vmem:[%s428 + $0x20] sm:$0xf]
        %v1348 = vld [vmem:[%s428 + $0x24] sm:$0xf]
        %v1349 = vld [vmem:[%s428 + $0x28] sm:$0xf]
        %v1350 = vld [vmem:[%s428 + $0x2c] sm:$0xf]
        %v1351 = vld [vmem:[%s428 + $0x30] sm:$0xf]
        %v1352 = vld [vmem:[%s428 + $0x34] sm:$0xf]
        %v1353 = vld [vmem:[%s428 + $0x38] sm:$0xf]
        %v1354 = vld [vmem:[%s428 + $0x3c] sm:$0xf]
        %v1371 = vunpack.c.l.b16 %v1339
        %v1372 = vunpack.c.l.b16 %v1340
        %v1373 = vunpack.c.l.b16 %v1341
        %v1374 = vunpack.c.l.b16 %v1342
        %v1375 = vunpack.c.l.b16 %v1343
        %v1376 = vunpack.c.l.b16 %v1344
        %v1377 = vunpack.c.l.b16 %v1345
        %v1378 = vunpack.c.l.b16 %v1346
        %v1379 = vunpack.c.l.b16 %v1347
        %v1380 = vunpack.c.l.b16 %v1348
        %v1381 = vunpack.c.l.b16 %v1349
        %v1382 = vunpack.c.l.b16 %v1350
        %v1383 = vunpack.c.l.b16 %v1351
        %v1384 = vunpack.c.l.b16 %v1352
        %v1385 = vunpack.c.l.b16 %v1353
        %v1386 = vunpack.c.l.b16 %v1354
        %v1387 = vpack.c.b16 %v1372, %v1371
        %v1388 = vpack.c.b16 %v1374, %v1373
        %v1389 = vpack.c.b16 %v1376, %v1375
        %v1390 = vpack.c.b16 %v1378, %v1377
        %v1391 = vpack.c.b16 %v1380, %v1379
        %v1392 = vpack.c.b16 %v1382, %v1381
        %v1393 = vpack.c.b16 %v1384, %v1383
        %v1394 = vpack.c.b16 %v1386, %v1385
        %1403 = vmatpush.bf16.msra.mxu0 %v1394
        %1404 = vmatpush.bf16.msra.mxu0 %v1393
        %1405 = vmatpush.bf16.msra.mxu0 %v1392
        %1406 = vmatpush.bf16.msra.mxu0 %v1391
        %1407 = vmatpush.bf16.msra.mxu0 %v1390
        %1408 = vmatpush.bf16.msra.mxu0 %v1389
        %1409 = vmatpush.bf16.msra.mxu0 %v1388
        %1410 = vmatpush.bf16.msra.mxu0 %v1387
        %1411 = vmatmul.bf16.gmra.mxu0 %v1338
        %v1412 = vpop.f32.mrf.mxu0
        %v1413 = vadd.f32 0.0, %v1412
        %v1414 = vpop.f32.mrf.mxu0
        %v1415 = vadd.f32 0.0, %v1414
        %1416 = vdwg.mxu0
        %v1417 = vadd.f32 %v1160, %v1413
        %v1418 = vadd.f32 %v1161, %v1415
        %v1419 = vperm.slane %v442, 5
        %v1420 = vadd.f32 %v1417, %v1419
        %v1421 = vadd.f32 %v1418, %v1419
        %p1422 = scmp.lt.s32.totalorder %s27, 1
        // Predicated region
        $region57: #{transformer_embedder_forward.1} parent=51 // pred_check
          %p1423 = pneg %p1422
        $region58: #{transformer_embedder_forward.1} parent=51 // pred_check_branch
          %1425 = sbr.rel (%p1423) target = $region60
        $region59: #{transformer_embedder_forward.1} parent=51 // pred_region
          %1426 = vst.msk [vmem:[%s395] sm:$0xff] %vm443, %v1420
          %1427 = vst.msk [vmem:[%s395 + $0x8] sm:$0xff] %vm443, %v1421
        $region60: #{transformer_embedder_forward.1} parent=51 // pred_fallthru
          _
        %p1428 = scmp.eq.s32.totalorder %s27, 1
        // Predicated region
        $region61: #{transformer_embedder_forward.1} parent=51 // pred_check
          %p1429 = pneg %p1428
        $region62: #{transformer_embedder_forward.1} parent=51 // pred_check_branch
          %1431 = sbr.rel (%p1429) target = $region64
        $region63: #{transformer_embedder_forward.1} parent=51 // pred_region
          %v1432 = vld [vmem:[%s7] sm:$0x3]
          %v1433 = vsel %vm443, %v1420, 0.0
          %1434 = vadd.xlane.f32.xlu0 %v1433
          %v1435 = vpop.xlane.xlu0 %1434
          %v1436 = vsel %vm443, %v1421, 0.0
          %1437 = vadd.xlane.f32.xlu0 %v1436
          %v1438 = vpop.xlane.xlu0 %1437
          %v1439 = vmul.f32 %v1435, %v456
          %v1440 = vmul.f32 %v1438, %v456
          %v1441 = vsub.f32 %v1420, %v1439
          %v1442 = vsub.f32 %v1421, %v1440
          %v1443 = vmul.f32 %v1441, %v1441
          %v1444 = vmul.f32 %v1442, %v1442
          %v1445 = vsel %vm443, %v1443, 0.0
          %1446 = vadd.xlane.f32.xlu0 %v1445
          %v1447 = vpop.xlane.xlu0 %1446
          %v1448 = vsel %vm443, %v1444, 0.0
          %1449 = vadd.xlane.f32.xlu0 %v1448
          %v1450 = vpop.xlane.xlu0 %1449
          %v1451 = vmul.f32 %v1447, %v456
          %v1452 = vmul.f32 %v1450, %v456
          %v1453 = vadd.f32 %v1451, 1e-05
          %v1454 = vadd.f32 %v1452, 1e-05
          %v1455 = vrsqrt.pop %v1453
          %v1456 = vmul.f32 %v1455, %v1453
          %v1457 = vmul.f32 %v1456, %v1455
          %v1458 = vmul.f32 0.5, %v1457
          %v1459 = vsub.f32 1.5, %v1458
          %v1460 = vmul.f32 %v1455, %v1459
          %vm1461 = vweird.f32 %v1453
          %vm1462 = vweird.f32 %v1455
          %vm1463 = vmor %vm1461, %vm1462
          %v1464 = vsel %vm1463, %v1455, %v1460
          %v1465 = vrsqrt.pop %v1454
          %v1466 = vmul.f32 %v1465, %v1454
          %v1467 = vmul.f32 %v1466, %v1465
          %v1468 = vmul.f32 0.5, %v1467
          %v1469 = vsub.f32 1.5, %v1468
          %v1470 = vmul.f32 %v1465, %v1469
          %vm1471 = vweird.f32 %v1454
          %vm1472 = vweird.f32 %v1465
          %vm1473 = vmor %vm1471, %vm1472
          %v1474 = vsel %vm1473, %v1465, %v1470
          %v1475 = vmul.f32 %v1441, %v1464
          %v1476 = vmul.f32 %v1442, %v1474
          %v1477 = vperm.slane %v1432, 0
          %v1478 = vmul.f32 %v1475, %v1477
          %v1479 = vmul.f32 %v1476, %v1477
          %v1480 = vperm.slane %v1432, 1
          %v1481 = vadd.f32 %v1478, %v1480
          %v1482 = vadd.f32 %v1479, %v1480
          %1483 = vst.msk [vmem:[%s395] sm:$0xff] %vm443, %v1481
          %1484 = vst.msk [vmem:[%s395 + $0x8] sm:$0xff] %vm443, %v1482
        $region64: #{transformer_embedder_forward.1} parent=51 // pred_fallthru
          _
        %s1485 = sand.u32 %s245, 1
        %s1486 = scalar_lea.sflag [#allocation3], %s1485
        %s1487 = sand.u32 %s245, 1
        %s1488 = smul.addr %s1487, 16
        %s1489 = scalar_lea.vmem [#allocation2], %s1488
        // Predicated region
        $region65: #{transformer_embedder_forward.1} parent=51 // pred_check
          %p1490 = pneg %p255
        $region66: #{transformer_embedder_forward.1} parent=51 // pred_check_branch
          %1492 = sbr.rel (%p1490) target = $region68
        $region67: #{transformer_embedder_forward.1} parent=51 // pred_region
          %s1493 = smul.u32 2, %s26
          %1495 = vsyncadd %s1486, 0
          %s1496 = smul.addr %s1493, 8
          %s1497 = scalar_lea.hbm %s8, %s1496
          %s1498 = sshll.u32 %s1489, 4
          %s1499 = int_to_ptr.vmem [resolvable:$true] %s1498
          %s1500 = sshll.u32 %s1497, 4
          %s1501 = int_to_ptr.hbm [resolvable:$true] %s1500
          %1506 = dma.vmem_to_hbm [thread:$0]  %s1499, 256, %s1501, %s1486, 128, 128, 8
        $region68: #{transformer_embedder_forward.1} parent=51 // pred_fallthru
          _
      $region52: #{transformer_embedder_forward.1} parent=5 // pred_fallthru
        _
      %p1507 = scmp.le.s32.totalorder 2, %s17
      // Predicated region
      $region69: #{transformer_embedder_forward.1} parent=5 // pred_check
        %p1508 = pneg %p1507
      $region70: #{transformer_embedder_forward.1} parent=5 // pred_check_branch
        %1510 = sbr.rel (%p1508) target = $region72
      $region71: #{transformer_embedder_forward.1} parent=5 // pred_region
        %s1511 = ssub.s32 %s17, 2
        // Predicated region
        $region73: #{transformer_embedder_forward.1} parent=71 // pred_check
          %p1512 = pneg %p261
        $region74: #{transformer_embedder_forward.1} parent=71 // pred_check_branch
          %1514 = sbr.rel (%p1512) target = $region76
        $region75: #{transformer_embedder_forward.1} parent=71 // pred_region
          %s1515 = sand.u32 %s246, 1
          %s1516 = scalar_lea.sflag [#allocation3], %s1515
          %s1517 = sand.u32 %s246, 1
          %s1518 = smul.addr %s1517, 16
          %s1519 = scalar_lea.vmem [#allocation2], %s1518
          %1521 = dma.done %s1516, 256
        $region76: #{transformer_embedder_forward.1} parent=71 // pred_fallthru
          _
      $region72: #{transformer_embedder_forward.1} parent=5 // pred_fallthru
        _
    $region6: #{transformer_embedder_forward.1} parent=1 // loop_footer
      %s21 = sadd.s32 1, %s17
    $region7: #{transformer_embedder_forward.1} parent=1 // loop_footer_branch
      %16 = sbr.rel target = $region3
    $region8: #{transformer_embedder_forward.1} parent=1 // loop_exit
      _
    %1522 = vsyncpa [#allocation3], 1
    %s1523 = scalar_lea.sflag [#allocation3], 1
    %1524 = vsyncpa %s1523, 1

</llo_original>
